<compile_context>
chip_gen: v7x
topology: tpu7x:2x2x1
jax: 0.10.0
libtpu: 0.0.40
codegen_flags: <defaults>
</compile_context>

<pallas_src>
import jax
import jax.numpy as jnp
import jax.scipy.linalg as jsl
from jax.experimental import pallas as pl
from jax.experimental.pallas import tpu as pltpu

# ---------------- model hyper-params (fixed by the module / small test) ------
INPUT_SIZE = 510
HIDDEN = 32
NUM_LAYERS = 2
FD_N = 16
BATCH = 2
SEQ = 8
OUT_PAD = 128   # lane-dense output width; real outputs live in columns 0..2


# ---------------- fused Pallas kernel ----------------------------------------
def fused_rnn_heads_kernel(x_ref,                       # (B, T, D)
                           wih0_ref, b0_ref,            # (D, H), (1, H)
                           whhblk_ref,                  # (2H, 2H) blockdiag(whh0ᵀ, whh1ᵀ)
                           wih1_ref, b1_ref,            # (H, H), (1, H)
                           w1_ref, c1_ref,              # (H, 3*FD_N), (1, 3*FD_N)
                           w2_ref, c2_ref,              # (3*FD_N, OUT_PAD), (1, OUT_PAD)
                           out_ref):                    # (B, OUT_PAD)
    B = x_ref.shape[0]
    T = x_ref.shape[1]
    H = wih1_ref.shape[0]

    wih0 = wih0_ref[...]
    b0 = b0_ref[...]
    whh_blk = whhblk_ref[...]
    wih1 = wih1_ref[...]
    b1b = jnp.broadcast_to(b1_ref[...], (B, H))          # hoisted broadcast

    # Hoisted layer-0 input projection: the 510-deep matmul is done once per
    # batch row up front, never on the serial recurrence path.
    pre = [jnp.dot(x_ref[b], wih0, preferred_element_type=jnp.float32) + b0
           for b in range(B)]                             # list of (T, H)

    # Packed state [h0 | h1], so both hidden-state matmuls share one MXU issue.
    h_cat = jnp.zeros((B, 2 * H), jnp.float32)
    h1 = jnp.zeros((B, H), jnp.float32)

    # Fully unrolled recurrence: 2 serial MXU matmuls per step.
    for t in range(T):
        x_t = jnp.concatenate([p[t:t + 1, :] for p in pre], axis=0)   # (B, H)
        hh = jnp.dot(h_cat, whh_blk, preferred_element_type=jnp.float32)  # (B, 2H)
        h0 = jnp.tanh(x_t + hh[:, :H])
        h1 = jnp.tanh(jnp.dot(h0, wih1, preferred_element_type=jnp.float32)
                      + hh[:, H:] + b1b)
        h_cat = jnp.concatenate([h0, h1], axis=1)

    # Heads: relu -> Linear(H, 3*FD_N fused) -> relu -> Linear(block-diag, padded).
    hr = jnp.maximum(h1, 0.0)
    z = jnp.maximum(jnp.dot(hr, w1_ref[...],
                            preferred_element_type=jnp.float32) + c1_ref[...],
                    0.0)                                  # (B, 3*FD_N)
    out_ref[...] = (jnp.dot(z, w2_ref[...],
                            preferred_element_type=jnp.float32)
                    + c2_ref[...]).astype(out_ref.dtype)  # (B, OUT_PAD)


# ---------------- one-time parameter fusion (call ONCE at init) --------------
def prepare_params(params):
    (wih0, whh0, bih0, bhh0), (wih1, whh1, bih1, bhh1) = params["rnn"]

    wih0_t = wih0.T                                       # (D, H)
    whh_blk = jsl.block_diag(whh0.T, whh1.T)              # (2H, 2H)
    wih1_t = wih1.T                                       # (H, H)
    b0 = (bih0 + bhh0)[None, :]                           # (1, H)
    b1 = (bih1 + bhh1)[None, :]                           # (1, H)

    w1s, b1s, w2s, b2s = zip(*params["heads"])
    w1cat = jnp.concatenate([w.T for w in w1s], axis=1)   # (H, 3*FD_N)
    c1cat = jnp.concatenate(list(b1s))[None, :]           # (1, 3*FD_N)
    w2blk = jsl.block_diag(*[w.T for w in w2s])           # (3*FD_N, 3)
    c2cat = jnp.concatenate(list(b2s))[None, :]           # (1, 3)
    w2pad = jnp.pad(w2blk, ((0, 0), (0, OUT_PAD - 3)))    # lane-dense store
    c2pad = jnp.pad(c2cat, ((0, 0), (0, OUT_PAD - 3)))

    return (wih0_t, b0, whh_blk, wih1_t, b1, w1cat, c1cat, w2pad, c2pad)


# ---------------- wrapper (jitted graph == one pallas_call) -------------------
def rnn_forward(x_btd, fused):
    """x_btd: (B, T, 510) batch_first. Returns fused (B, OUT_PAD); cols 0..2 are
    outx/outy/outw — slice OUTSIDE jit to keep the per-call op count at one."""
    B = x_btd.shape[0]
    wih0_t, b0, whh_blk, wih1_t, b1, w1cat, c1cat, w2pad, c2pad = fused
    vmem = pl.BlockSpec(memory_space=pltpu.MemorySpace.VMEM)
    return pl.pallas_call(
        fused_rnn_heads_kernel,
        out_shape=jax.ShapeDtypeStruct((B, OUT_PAD), jnp.float32),
        in_specs=[vmem] * 10,
        out_specs=vmem,
    )(x_btd.astype(jnp.float32),
      wih0_t, b0, whh_blk, wih1_t, b1, w1cat, c1cat, w2pad, c2pad)


rnn_forward_jit = jax.jit(rnn_forward)


# ---------------- parameter construction (deterministic, synthetic) ----------
def init_params(key):
    params = {"rnn": [], "heads": []}
    k_rnn = 1.0 / jnp.sqrt(HIDDEN)
    for l in range(NUM_LAYERS):
        d_in = INPUT_SIZE if l == 0 else HIDDEN
        key, k1, k2, k3, k4 = jax.random.split(key, 5)
        w_ih = jax.random.uniform(k1, (HIDDEN, d_in), jnp.float32, -k_rnn, k_rnn)
        w_hh = jax.random.uniform(k2, (HIDDEN, HIDDEN), jnp.float32, -k_rnn, k_rnn)
        b_ih = jax.random.uniform(k3, (HIDDEN,), jnp.float32, -k_rnn, k_rnn)
        b_hh = jax.random.uniform(k4, (HIDDEN,), jnp.float32, -k_rnn, k_rnn)
        params["rnn"].append((w_ih, w_hh, b_ih, b_hh))
    for _ in range(3):  # fcx/fcx2, fcy/fcy2, fcw/fcw2
        key, k1, k2, k3, k4 = jax.random.split(key, 5)
        k_l1 = 1.0 / jnp.sqrt(HIDDEN)
        k_l2 = 1.0 / jnp.sqrt(FD_N)
        w1 = jax.random.uniform(k1, (FD_N, HIDDEN), jnp.float32, -k_l1, k_l1)
        b1 = jax.random.uniform(k2, (FD_N,), jnp.float32, -k_l1, k_l1)
        w2 = jax.random.uniform(k3, (1, FD_N), jnp.float32, -k_l2, k_l2)
        b2 = jax.random.uniform(k4, (1,), jnp.float32, -k_l2, k_l2)
        params["heads"].append((w1, b1, w2, b2))
    return params


# ---------------- pure-JAX reference ------------------------------------------
def ref_forward(x_btd, params):
    B, T, _ = x_btd.shape
    seq = x_btd.astype(jnp.float32)
    for (w_ih, w_hh, b_ih, b_hh) in params["rnn"]:
        h = jnp.zeros((B, HIDDEN), jnp.float32)
        outs = []
        for t in range(T):
            h = jnp.tanh(seq[:, t] @ w_ih.T + h @ w_hh.T + b_ih + b_hh)
            outs.append(h)
        seq = jnp.stack(outs, axis=1)
    hl = jax.nn.relu(seq[:, -1])
    res = []
    for (w1, b1, w2, b2) in params["heads"]:
        z = jax.nn.relu(hl @ w1.T + b1)
        res.append(z @ w2.T + b2)
    return tuple(res)


if __name__ == "__main__":
    key = jax.random.PRNGKey(0)
    key, kx, kp = jax.random.split(key, 3)
    x = jax.random.normal(kx, (BATCH, SEQ, INPUT_SIZE), jnp.float32)
    params = init_params(kp)

    # One-time weight fusion (outside the per-call path).
    fused = prepare_params(params)
    fused = jax.block_until_ready(fused)

    out = rnn_forward_jit(x, fused)
    jax.block_until_ready(out)

    # Split into (outx, outy, outw) OUTSIDE the jitted forward.
    outx, outy, outw = out[:, 0:1], out[:, 1:2], out[:, 2:3]

    rx, ry, rw = ref_forward(x, params)
    for got, ref in ((outx, rx), (outy, ry), (outw, rw)):
        assert got.shape == (BATCH, 1)
        assert jnp.allclose(got, ref, atol=1e-4, rtol=1e-4), (got, ref)

    print("KERNEL_OK")
</pallas_src>

<mosaic_0001>
module attributes {stable_mosaic.version = 11 : i64} {
  func.func @fused_rnn_heads_kernel(%arg0: memref<2x8x510xf32, #tpu.memory_space<vmem>>, %arg1: memref<510x32xf32, #tpu.memory_space<vmem>>, %arg2: memref<1x32xf32, #tpu.memory_space<vmem>>, %arg3: memref<64x64xf32, #tpu.memory_space<vmem>>, %arg4: memref<32x32xf32, #tpu.memory_space<vmem>>, %arg5: memref<1x32xf32, #tpu.memory_space<vmem>>, %arg6: memref<32x48xf32, #tpu.memory_space<vmem>>, %arg7: memref<1x48xf32, #tpu.memory_space<vmem>>, %arg8: memref<48x128xf32, #tpu.memory_space<vmem>>, %arg9: memref<1x128xf32, #tpu.memory_space<vmem>>, %arg10: memref<2x128xf32, #tpu.memory_space<vmem>>) attributes {dimension_semantics = [], scalar_prefetch = 0 : i64, scratch_operands = 0 : i64, tpu.core_type = #tpu.core_type<tc>} {
    %c0 = arith.constant 0 : index
    %c0_0 = arith.constant 0 : index
    %0 = vector.load %arg1[%c0, %c0_0] : memref<510x32xf32, #tpu.memory_space<vmem>>, vector<510x32xf32>
    %c0_1 = arith.constant 0 : index
    %c0_2 = arith.constant 0 : index
    %1 = vector.load %arg2[%c0_1, %c0_2] : memref<1x32xf32, #tpu.memory_space<vmem>>, vector<1x32xf32>
    %c0_3 = arith.constant 0 : index
    %c0_4 = arith.constant 0 : index
    %2 = vector.load %arg3[%c0_3, %c0_4] : memref<64x64xf32, #tpu.memory_space<vmem>>, vector<64x64xf32>
    %c0_5 = arith.constant 0 : index
    %c0_6 = arith.constant 0 : index
    %3 = vector.load %arg4[%c0_5, %c0_6] : memref<32x32xf32, #tpu.memory_space<vmem>>, vector<32x32xf32>
    %c0_7 = arith.constant 0 : index
    %c0_8 = arith.constant 0 : index
    %4 = vector.load %arg5[%c0_7, %c0_8] : memref<1x32xf32, #tpu.memory_space<vmem>>, vector<1x32xf32>
    %5 = vector.shape_cast %4 : vector<1x32xf32> to vector<1x32xf32>
    %6 = vector.broadcast %5 : vector<1x32xf32> to vector<2x32xf32>
    %c0_9 = arith.constant 0 : index
    %c0_10 = arith.constant 0 : index
    %c0_11 = arith.constant 0 : index
    %7 = vector.load %arg0[%c0_9, %c0_10, %c0_11] : memref<2x8x510xf32, #tpu.memory_space<vmem>>, vector<1x8x510xf32>
    %8 = vector.shape_cast %7 : vector<1x8x510xf32> to vector<8x510xf32>
    %cst = arith.constant dense<0.000000e+00> : vector<8x32xf32>
    %9 = tpu.matmul %8, %0, %cst {dimension_numbers = #tpu.dot_dimension_numbers<[1], [0], [0], [1], [0, 0, 1, 1], [], []>} : vector<8x510xf32>, vector<510x32xf32>, vector<8x32xf32> -> vector<8x32xf32>
    %10 = vector.broadcast %1 : vector<1x32xf32> to vector<8x32xf32>
    %11 = arith.addf %9, %10 : vector<8x32xf32>
    %c1 = arith.constant 1 : index
    %c0_12 = arith.constant 0 : index
    %c0_13 = arith.constant 0 : index
    %12 = vector.load %arg0[%c1, %c0_12, %c0_13] : memref<2x8x510xf32, #tpu.memory_space<vmem>>, vector<1x8x510xf32>
    %13 = vector.shape_cast %12 : vector<1x8x510xf32> to vector<8x510xf32>
    %cst_14 = arith.constant dense<0.000000e+00> : vector<8x32xf32>
    %14 = tpu.matmul %13, %0, %cst_14 {dimension_numbers = #tpu.dot_dimension_numbers<[1], [0], [0], [1], [0, 0, 1, 1], [], []>} : vector<8x510xf32>, vector<510x32xf32>, vector<8x32xf32> -> vector<8x32xf32>
    %15 = vector.broadcast %1 : vector<1x32xf32> to vector<8x32xf32>
    %16 = arith.addf %14, %15 : vector<8x32xf32>
    %cst_15 = arith.constant 0.000000e+00 : f32
    %17 = vector.broadcast %cst_15 : f32 to vector<2x64xf32>
    %18 = vector.extract_strided_slice %11 {offsets = [0, 0], sizes = [1, 32], strides = [1, 1]} : vector<8x32xf32> to vector<1x32xf32>
    %19 = vector.extract_strided_slice %16 {offsets = [0, 0], sizes = [1, 32], strides = [1, 1]} : vector<8x32xf32> to vector<1x32xf32>
    %20 = tpu.concatenate %18, %19 in 0 : vector<1x32xf32>, vector<1x32xf32> -> vector<2x32xf32>
    %cst_16 = arith.constant dense<0.000000e+00> : vector<2x64xf32>
    %21 = tpu.matmul %17, %2, %cst_16 {dimension_numbers = #tpu.dot_dimension_numbers<[1], [0], [0], [1], [0, 0, 1, 1], [], []>} : vector<2x64xf32>, vector<64x64xf32>, vector<2x64xf32> -> vector<2x64xf32>
    %22 = vector.extract_strided_slice %21 {offsets = [0, 0], sizes = [2, 32], strides = [1, 1]} : vector<2x64xf32> to vector<2x32xf32>
    %23 = arith.addf %20, %22 : vector<2x32xf32>
    %24 = math.tanh %23 : vector<2x32xf32>
    %cst_17 = arith.constant dense<0.000000e+00> : vector<2x32xf32>
    %25 = tpu.matmul %24, %3, %cst_17 {dimension_numbers = #tpu.dot_dimension_numbers<[1], [0], [0], [1], [0, 0, 1, 1], [], []>} : vector<2x32xf32>, vector<32x32xf32>, vector<2x32xf32> -> vector<2x32xf32>
    %26 = vector.extract_strided_slice %21 {offsets = [0, 32], sizes = [2, 32], strides = [1, 1]} : vector<2x64xf32> to vector<2x32xf32>
    %27 = arith.addf %25, %26 : vector<2x32xf32>
    %28 = arith.addf %27, %6 : vector<2x32xf32>
    %29 = math.tanh %28 : vector<2x32xf32>
    %30 = tpu.concatenate %24, %29 in 1 : vector<2x32xf32>, vector<2x32xf32> -> vector<2x64xf32>
    %31 = vector.extract_strided_slice %11 {offsets = [1, 0], sizes = [1, 32], strides = [1, 1]} : vector<8x32xf32> to vector<1x32xf32>
    %32 = vector.extract_strided_slice %16 {offsets = [1, 0], sizes = [1, 32], strides = [1, 1]} : vector<8x32xf32> to vector<1x32xf32>
    %33 = tpu.concatenate %31, %32 in 0 : vector<1x32xf32>, vector<1x32xf32> -> vector<2x32xf32>
    %cst_18 = arith.constant dense<0.000000e+00> : vector<2x64xf32>
    %34 = tpu.matmul %30, %2, %cst_18 {dimension_numbers = #tpu.dot_dimension_numbers<[1], [0], [0], [1], [0, 0, 1, 1], [], []>} : vector<2x64xf32>, vector<64x64xf32>, vector<2x64xf32> -> vector<2x64xf32>
    %35 = vector.extract_strided_slice %34 {offsets = [0, 0], sizes = [2, 32], strides = [1, 1]} : vector<2x64xf32> to vector<2x32xf32>
    %36 = arith.addf %33, %35 : vector<2x32xf32>
    %37 = math.tanh %36 : vector<2x32xf32>
    %cst_19 = arith.constant dense<0.000000e+00> : vector<2x32xf32>
    %38 = tpu.matmul %37, %3, %cst_19 {dimension_numbers = #tpu.dot_dimension_numbers<[1], [0], [0], [1], [0, 0, 1, 1], [], []>} : vector<2x32xf32>, vector<32x32xf32>, vector<2x32xf32> -> vector<2x32xf32>
    %39 = vector.extract_strided_slice %34 {offsets = [0, 32], sizes = [2, 32], strides = [1, 1]} : vector<2x64xf32> to vector<2x32xf32>
    %40 = arith.addf %38, %39 : vector<2x32xf32>
    %41 = arith.addf %40, %6 : vector<2x32xf32>
    %42 = math.tanh %41 : vector<2x32xf32>
    %43 = tpu.concatenate %37, %42 in 1 : vector<2x32xf32>, vector<2x32xf32> -> vector<2x64xf32>
    %44 = vector.extract_strided_slice %11 {offsets = [2, 0], sizes = [1, 32], strides = [1, 1]} : vector<8x32xf32> to vector<1x32xf32>
    %45 = vector.extract_strided_slice %16 {offsets = [2, 0], sizes = [1, 32], strides = [1, 1]} : vector<8x32xf32> to vector<1x32xf32>
    %46 = tpu.concatenate %44, %45 in 0 : vector<1x32xf32>, vector<1x32xf32> -> vector<2x32xf32>
    %cst_20 = arith.constant dense<0.000000e+00> : vector<2x64xf32>
    %47 = tpu.matmul %43, %2, %cst_20 {dimension_numbers = #tpu.dot_dimension_numbers<[1], [0], [0], [1], [0, 0, 1, 1], [], []>} : vector<2x64xf32>, vector<64x64xf32>, vector<2x64xf32> -> vector<2x64xf32>
    %48 = vector.extract_strided_slice %47 {offsets = [0, 0], sizes = [2, 32], strides = [1, 1]} : vector<2x64xf32> to vector<2x32xf32>
    %49 = arith.addf %46, %48 : vector<2x32xf32>
    %50 = math.tanh %49 : vector<2x32xf32>
    %cst_21 = arith.constant dense<0.000000e+00> : vector<2x32xf32>
    %51 = tpu.matmul %50, %3, %cst_21 {dimension_numbers = #tpu.dot_dimension_numbers<[1], [0], [0], [1], [0, 0, 1, 1], [], []>} : vector<2x32xf32>, vector<32x32xf32>, vector<2x32xf32> -> vector<2x32xf32>
    %52 = vector.extract_strided_slice %47 {offsets = [0, 32], sizes = [2, 32], strides = [1, 1]} : vector<2x64xf32> to vector<2x32xf32>
    %53 = arith.addf %51, %52 : vector<2x32xf32>
    %54 = arith.addf %53, %6 : vector<2x32xf32>
    %55 = math.tanh %54 : vector<2x32xf32>
    %56 = tpu.concatenate %50, %55 in 1 : vector<2x32xf32>, vector<2x32xf32> -> vector<2x64xf32>
    %57 = vector.extract_strided_slice %11 {offsets = [3, 0], sizes = [1, 32], strides = [1, 1]} : vector<8x32xf32> to vector<1x32xf32>
    %58 = vector.extract_strided_slice %16 {offsets = [3, 0], sizes = [1, 32], strides = [1, 1]} : vector<8x32xf32> to vector<1x32xf32>
    %59 = tpu.concatenate %57, %58 in 0 : vector<1x32xf32>, vector<1x32xf32> -> vector<2x32xf32>
    %cst_22 = arith.constant dense<0.000000e+00> : vector<2x64xf32>
    %60 = tpu.matmul %56, %2, %cst_22 {dimension_numbers = #tpu.dot_dimension_numbers<[1], [0], [0], [1], [0, 0, 1, 1], [], []>} : vector<2x64xf32>, vector<64x64xf32>, vector<2x64xf32> -> vector<2x64xf32>
    %61 = vector.extract_strided_slice %60 {offsets = [0, 0], sizes = [2, 32], strides = [1, 1]} : vector<2x64xf32> to vector<2x32xf32>
    %62 = arith.addf %59, %61 : vector<2x32xf32>
    %63 = math.tanh %62 : vector<2x32xf32>
    %cst_23 = arith.constant dense<0.000000e+00> : vector<2x32xf32>
    %64 = tpu.matmul %63, %3, %cst_23 {dimension_numbers = #tpu.dot_dimension_numbers<[1], [0], [0], [1], [0, 0, 1, 1], [], []>} : vector<2x32xf32>, vector<32x32xf32>, vector<2x32xf32> -> vector<2x32xf32>
    %65 = vector.extract_strided_slice %60 {offsets = [0, 32], sizes = [2, 32], strides = [1, 1]} : vector<2x64xf32> to vector<2x32xf32>
    %66 = arith.addf %64, %65 : vector<2x32xf32>
    %67 = arith.addf %66, %6 : vector<2x32xf32>
    %68 = math.tanh %67 : vector<2x32xf32>
    %69 = tpu.concatenate %63, %68 in 1 : vector<2x32xf32>, vector<2x32xf32> -> vector<2x64xf32>
    %70 = vector.extract_strided_slice %11 {offsets = [4, 0], sizes = [1, 32], strides = [1, 1]} : vector<8x32xf32> to vector<1x32xf32>
    %71 = vector.extract_strided_slice %16 {offsets = [4, 0], sizes = [1, 32], strides = [1, 1]} : vector<8x32xf32> to vector<1x32xf32>
    %72 = tpu.concatenate %70, %71 in 0 : vector<1x32xf32>, vector<1x32xf32> -> vector<2x32xf32>
    %cst_24 = arith.constant dense<0.000000e+00> : vector<2x64xf32>
    %73 = tpu.matmul %69, %2, %cst_24 {dimension_numbers = #tpu.dot_dimension_numbers<[1], [0], [0], [1], [0, 0, 1, 1], [], []>} : vector<2x64xf32>, vector<64x64xf32>, vector<2x64xf32> -> vector<2x64xf32>
    %74 = vector.extract_strided_slice %73 {offsets = [0, 0], sizes = [2, 32], strides = [1, 1]} : vector<2x64xf32> to vector<2x32xf32>
    %75 = arith.addf %72, %74 : vector<2x32xf32>
    %76 = math.tanh %75 : vector<2x32xf32>
    %cst_25 = arith.constant dense<0.000000e+00> : vector<2x32xf32>
    %77 = tpu.matmul %76, %3, %cst_25 {dimension_numbers = #tpu.dot_dimension_numbers<[1], [0], [0], [1], [0, 0, 1, 1], [], []>} : vector<2x32xf32>, vector<32x32xf32>, vector<2x32xf32> -> vector<2x32xf32>
    %78 = vector.extract_strided_slice %73 {offsets = [0, 32], sizes = [2, 32], strides = [1, 1]} : vector<2x64xf32> to vector<2x32xf32>
    %79 = arith.addf %77, %78 : vector<2x32xf32>
    %80 = arith.addf %79, %6 : vector<2x32xf32>
    %81 = math.tanh %80 : vector<2x32xf32>
    %82 = tpu.concatenate %76, %81 in 1 : vector<2x32xf32>, vector<2x32xf32> -> vector<2x64xf32>
    %83 = vector.extract_strided_slice %11 {offsets = [5, 0], sizes = [1, 32], strides = [1, 1]} : vector<8x32xf32> to vector<1x32xf32>
    %84 = vector.extract_strided_slice %16 {offsets = [5, 0], sizes = [1, 32], strides = [1, 1]} : vector<8x32xf32> to vector<1x32xf32>
    %85 = tpu.concatenate %83, %84 in 0 : vector<1x32xf32>, vector<1x32xf32> -> vector<2x32xf32>
    %cst_26 = arith.constant dense<0.000000e+00> : vector<2x64xf32>
    %86 = tpu.matmul %82, %2, %cst_26 {dimension_numbers = #tpu.dot_dimension_numbers<[1], [0], [0], [1], [0, 0, 1, 1], [], []>} : vector<2x64xf32>, vector<64x64xf32>, vector<2x64xf32> -> vector<2x64xf32>
    %87 = vector.extract_strided_slice %86 {offsets = [0, 0], sizes = [2, 32], strides = [1, 1]} : vector<2x64xf32> to vector<2x32xf32>
    %88 = arith.addf %85, %87 : vector<2x32xf32>
    %89 = math.tanh %88 : vector<2x32xf32>
    %cst_27 = arith.constant dense<0.000000e+00> : vector<2x32xf32>
    %90 = tpu.matmul %89, %3, %cst_27 {dimension_numbers = #tpu.dot_dimension_numbers<[1], [0], [0], [1], [0, 0, 1, 1], [], []>} : vector<2x32xf32>, vector<32x32xf32>, vector<2x32xf32> -> vector<2x32xf32>
    %91 = vector.extract_strided_slice %86 {offsets = [0, 32], sizes = [2, 32], strides = [1, 1]} : vector<2x64xf32> to vector<2x32xf32>
    %92 = arith.addf %90, %91 : vector<2x32xf32>
    %93 = arith.addf %92, %6 : vector<2x32xf32>
    %94 = math.tanh %93 : vector<2x32xf32>
    %95 = tpu.concatenate %89, %94 in 1 : vector<2x32xf32>, vector<2x32xf32> -> vector<2x64xf32>
    %96 = vector.extract_strided_slice %11 {offsets = [6, 0], sizes = [1, 32], strides = [1, 1]} : vector<8x32xf32> to vector<1x32xf32>
    %97 = vector.extract_strided_slice %16 {offsets = [6, 0], sizes = [1, 32], strides = [1, 1]} : vector<8x32xf32> to vector<1x32xf32>
    %98 = tpu.concatenate %96, %97 in 0 : vector<1x32xf32>, vector<1x32xf32> -> vector<2x32xf32>
    %cst_28 = arith.constant dense<0.000000e+00> : vector<2x64xf32>
    %99 = tpu.matmul %95, %2, %cst_28 {dimension_numbers = #tpu.dot_dimension_numbers<[1], [0], [0], [1], [0, 0, 1, 1], [], []>} : vector<2x64xf32>, vector<64x64xf32>, vector<2x64xf32> -> vector<2x64xf32>
    %100 = vector.extract_strided_slice %99 {offsets = [0, 0], sizes = [2, 32], strides = [1, 1]} : vector<2x64xf32> to vector<2x32xf32>
    %101 = arith.addf %98, %100 : vector<2x32xf32>
    %102 = math.tanh %101 : vector<2x32xf32>
    %cst_29 = arith.constant dense<0.000000e+00> : vector<2x32xf32>
    %103 = tpu.matmul %102, %3, %cst_29 {dimension_numbers = #tpu.dot_dimension_numbers<[1], [0], [0], [1], [0, 0, 1, 1], [], []>} : vector<2x32xf32>, vector<32x32xf32>, vector<2x32xf32> -> vector<2x32xf32>
    %104 = vector.extract_strided_slice %99 {offsets = [0, 32], sizes = [2, 32], strides = [1, 1]} : vector<2x64xf32> to vector<2x32xf32>
    %105 = arith.addf %103, %104 : vector<2x32xf32>
    %106 = arith.addf %105, %6 : vector<2x32xf32>
    %107 = math.tanh %106 : vector<2x32xf32>
    %108 = tpu.concatenate %102, %107 in 1 : vector<2x32xf32>, vector<2x32xf32> -> vector<2x64xf32>
    %109 = vector.extract_strided_slice %11 {offsets = [7, 0], sizes = [1, 32], strides = [1, 1]} : vector<8x32xf32> to vector<1x32xf32>
    %110 = vector.extract_strided_slice %16 {offsets = [7, 0], sizes = [1, 32], strides = [1, 1]} : vector<8x32xf32> to vector<1x32xf32>
    %111 = tpu.concatenate %109, %110 in 0 : vector<1x32xf32>, vector<1x32xf32> -> vector<2x32xf32>
    %cst_30 = arith.constant dense<0.000000e+00> : vector<2x64xf32>
    %112 = tpu.matmul %108, %2, %cst_30 {dimension_numbers = #tpu.dot_dimension_numbers<[1], [0], [0], [1], [0, 0, 1, 1], [], []>} : vector<2x64xf32>, vector<64x64xf32>, vector<2x64xf32> -> vector<2x64xf32>
    %113 = vector.extract_strided_slice %112 {offsets = [0, 0], sizes = [2, 32], strides = [1, 1]} : vector<2x64xf32> to vector<2x32xf32>
    %114 = arith.addf %111, %113 : vector<2x32xf32>
    %115 = math.tanh %114 : vector<2x32xf32>
    %cst_31 = arith.constant dense<0.000000e+00> : vector<2x32xf32>
    %116 = tpu.matmul %115, %3, %cst_31 {dimension_numbers = #tpu.dot_dimension_numbers<[1], [0], [0], [1], [0, 0, 1, 1], [], []>} : vector<2x32xf32>, vector<32x32xf32>, vector<2x32xf32> -> vector<2x32xf32>
    %117 = vector.extract_strided_slice %112 {offsets = [0, 32], sizes = [2, 32], strides = [1, 1]} : vector<2x64xf32> to vector<2x32xf32>
    %118 = arith.addf %116, %117 : vector<2x32xf32>
    %119 = arith.addf %118, %6 : vector<2x32xf32>
    %120 = math.tanh %119 : vector<2x32xf32>
    %cst_32 = arith.constant 0.000000e+00 : f32
    %121 = vector.broadcast %cst_32 : f32 to vector<2x32xf32>
    %122 = arith.maximumf %120, %121 : vector<2x32xf32>
    %c0_33 = arith.constant 0 : index
    %c0_34 = arith.constant 0 : index
    %123 = vector.load %arg6[%c0_33, %c0_34] : memref<32x48xf32, #tpu.memory_space<vmem>>, vector<32x48xf32>
    %cst_35 = arith.constant dense<0.000000e+00> : vector<2x48xf32>
    %124 = tpu.matmul %122, %123, %cst_35 {dimension_numbers = #tpu.dot_dimension_numbers<[1], [0], [0], [1], [0, 0, 1, 1], [], []>} : vector<2x32xf32>, vector<32x48xf32>, vector<2x48xf32> -> vector<2x48xf32>
    %c0_36 = arith.constant 0 : index
    %c0_37 = arith.constant 0 : index
    %125 = vector.load %arg7[%c0_36, %c0_37] : memref<1x48xf32, #tpu.memory_space<vmem>>, vector<1x48xf32>
    %126 = vector.broadcast %125 : vector<1x48xf32> to vector<2x48xf32>
    %127 = arith.addf %124, %126 : vector<2x48xf32>
    %cst_38 = arith.constant 0.000000e+00 : f32
    %128 = vector.broadcast %cst_38 : f32 to vector<2x48xf32>
    %129 = arith.maximumf %127, %128 : vector<2x48xf32>
    %c0_39 = arith.constant 0 : index
    %c0_40 = arith.constant 0 : index
    %130 = vector.load %arg8[%c0_39, %c0_40] : memref<48x128xf32, #tpu.memory_space<vmem>>, vector<48x128xf32>
    %cst_41 = arith.constant dense<0.000000e+00> : vector<2x128xf32>
    %131 = tpu.matmul %129, %130, %cst_41 {dimension_numbers = #tpu.dot_dimension_numbers<[1], [0], [0], [1], [0, 0, 1, 1], [], []>} : vector<2x48xf32>, vector<48x128xf32>, vector<2x128xf32> -> vector<2x128xf32>
    %c0_42 = arith.constant 0 : index
    %c0_43 = arith.constant 0 : index
    %132 = vector.load %arg9[%c0_42, %c0_43] : memref<1x128xf32, #tpu.memory_space<vmem>>, vector<1x128xf32>
    %133 = vector.broadcast %132 : vector<1x128xf32> to vector<2x128xf32>
    %134 = arith.addf %131, %133 : vector<2x128xf32>
    %c0_44 = arith.constant 0 : index
    %c0_45 = arith.constant 0 : index
    %135 = vector.load %arg10[%c0_44, %c0_45] : memref<2x128xf32, #tpu.memory_space<vmem>>, vector<2x128xf32>
    tpu.vector_store %arg10[%c0_44, %c0_45], %134 {strides = array<i32>} : memref<2x128xf32, #tpu.memory_space<vmem>>, vector<2x128xf32>,
    return
  }
}

</mosaic_0001>

<llo_original>
// kernel: rnn_forward.1
$region0: #{rnn_forward.1}
  #allocation0 [shape = 'u32[]', space=smem, size = 0x4, offset = 0x4, fixed_abs, tag = 'smem constant byte address 0x4 - core index']
  #allocation1 [shape = 'u32[144,128]{1,0:T(1,128)}', space=vmem, size = 0x12000, scoped, tag = 'internal scratch']
  %s0 = inlined_call_operand.vmem [shape: f32[2,8,510], index: 0, kind: input, shape index: {}]
  %s1 = inlined_call_operand.vmem [shape: f32[510,32], index: 1, kind: input, shape index: {}]
  %s2 = inlined_call_operand.vmem [shape: f32[1,32], index: 2, kind: input, shape index: {}]
  %s3 = inlined_call_operand.vmem [shape: f32[64,64], index: 3, kind: input, shape index: {}]
  %s4 = inlined_call_operand.vmem [shape: f32[32,32], index: 4, kind: input, shape index: {}]
  %s5 = inlined_call_operand.vmem [shape: f32[1,32], index: 5, kind: input, shape index: {}]
  %s6 = inlined_call_operand.vmem [shape: f32[32,48], index: 6, kind: input, shape index: {}]
  %s7 = inlined_call_operand.vmem [shape: f32[1,48], index: 7, kind: input, shape index: {}]
  %s8 = inlined_call_operand.vmem [shape: f32[48,128], index: 8, kind: input, shape index: {}]
  %s9 = inlined_call_operand.vmem [shape: f32[1,128], index: 9, kind: input, shape index: {}]
  %s10 = inlined_call_operand.hbm [shape: f32[2,128], index: 10, kind: output, shape index: {}]
  %s11 = sld [smem:[#allocation0]]
  $region50: #{rnn_forward.1} parent=0
    _
  %s13 = ssub.s32 1, %s11
  %s14 = scalar_select 0, %s13, %s11
  $region1: #{rnn_forward.1} parent=0
    #allocation2 [shape = 'u8[1024]{0}', space=vmem, size = 0x400, scoped, tag = 'output window, operand 0, single buffered']
    #allocation3 [shape = 's32[1]{0}', space=sflag, size = 0x4, scoped, tag = 'scoped memory for rnn_forward.1']
    %15 = vsyncpa [#allocation3], 0
    // Predicated region
    $region2: #{rnn_forward.1} parent=1 // pred_check
      _
    $region3: #{rnn_forward.1} parent=1 // pred_check_branch
      %17 = sbr.rel (0) target = $region5
    $region4: #{rnn_forward.1} parent=1 // pred_region
      _
    $region5: #{rnn_forward.1} parent=1 // pred_fallthru
      _
    // Predicated region
    $region6: #{rnn_forward.1} parent=1 // pred_check
      _
    $region7: #{rnn_forward.1} parent=1 // pred_check_branch
      %19 = sbr.rel (0) target = $region9
    $region8: #{rnn_forward.1} parent=1 // pred_region
      _
    $region9: #{rnn_forward.1} parent=1 // pred_fallthru
      _
    // Predicated region
    $region10: #{rnn_forward.1} parent=1 // pred_check
      _
    $region11: #{rnn_forward.1} parent=1 // pred_check_branch
      %21 = sbr.rel (0) target = $region13
    $region12: #{rnn_forward.1} parent=1 // pred_region
      _
    $region13: #{rnn_forward.1} parent=1 // pred_fallthru
      _
    // Predicated region
    $region14: #{rnn_forward.1} parent=1 // pred_check
      _
    $region15: #{rnn_forward.1} parent=1 // pred_check_branch
      %23 = sbr.rel (0) target = $region17
    $region16: #{rnn_forward.1} parent=1 // pred_region
      _
    $region17: #{rnn_forward.1} parent=1 // pred_fallthru
      _
    // Predicated region
    $region18: #{rnn_forward.1} parent=1 // pred_check
      _
    $region19: #{rnn_forward.1} parent=1 // pred_check_branch
      %25 = sbr.rel (0) target = $region21
    $region20: #{rnn_forward.1} parent=1 // pred_region
      _
    $region21: #{rnn_forward.1} parent=1 // pred_fallthru
      _
    // Predicated region
    $region22: #{rnn_forward.1} parent=1 // pred_check
      _
    $region23: #{rnn_forward.1} parent=1 // pred_check_branch
      %27 = sbr.rel (0) target = $region25
    $region24: #{rnn_forward.1} parent=1 // pred_region
      _
    $region25: #{rnn_forward.1} parent=1 // pred_fallthru
      _
    // Predicated region
    $region26: #{rnn_forward.1} parent=1 // pred_check
      _
    $region27: #{rnn_forward.1} parent=1 // pred_check_branch
      %29 = sbr.rel (0) target = $region29
    $region28: #{rnn_forward.1} parent=1 // pred_region
      _
    $region29: #{rnn_forward.1} parent=1 // pred_fallthru
      _
    // Predicated region
    $region30: #{rnn_forward.1} parent=1 // pred_check
      _
    $region31: #{rnn_forward.1} parent=1 // pred_check_branch
      %31 = sbr.rel (0) target = $region33
    $region32: #{rnn_forward.1} parent=1 // pred_region
      _
    $region33: #{rnn_forward.1} parent=1 // pred_fallthru
      _
    // Predicated region
    $region34: #{rnn_forward.1} parent=1 // pred_check
      _
    $region35: #{rnn_forward.1} parent=1 // pred_check_branch
      %33 = sbr.rel (0) target = $region37
    $region36: #{rnn_forward.1} parent=1 // pred_region
      _
    $region37: #{rnn_forward.1} parent=1 // pred_fallthru
      _
    // Predicated region
    $region38: #{rnn_forward.1} parent=1 // pred_check
      _
    $region39: #{rnn_forward.1} parent=1 // pred_check_branch
      %35 = sbr.rel (0) target = $region41
    $region40: #{rnn_forward.1} parent=1 // pred_region
      _
    $region41: #{rnn_forward.1} parent=1 // pred_fallthru
      _
    %v36 = vld [vmem:[%s1] sm:$0xff]
    %v37 = vld [vmem:[%s1 + $0x8] sm:$0xff]
    %v38 = vld [vmem:[%s1 + $0x10] sm:$0xff]
    %v39 = vld [vmem:[%s1 + $0x18] sm:$0xff]
    %v40 = vld [vmem:[%s1 + $0x20] sm:$0xff]
    %v41 = vld [vmem:[%s1 + $0x28] sm:$0xff]
    %v42 = vld [vmem:[%s1 + $0x30] sm:$0xff]
    %v43 = vld [vmem:[%s1 + $0x38] sm:$0xff]
    %v44 = vld [vmem:[%s1 + $0x40] sm:$0xff]
    %v45 = vld [vmem:[%s1 + $0x48] sm:$0xff]
    %v46 = vld [vmem:[%s1 + $0x50] sm:$0xff]
    %v47 = vld [vmem:[%s1 + $0x58] sm:$0xff]
    %v48 = vld [vmem:[%s1 + $0x60] sm:$0xff]
    %v49 = vld [vmem:[%s1 + $0x68] sm:$0xff]
    %v50 = vld [vmem:[%s1 + $0x70] sm:$0xff]
    %v51 = vld [vmem:[%s1 + $0x78] sm:$0xff]
    %v52 = vld [vmem:[%s1 + $0x80] sm:$0xff]
    %v53 = vld [vmem:[%s1 + $0x88] sm:$0xff]
    %v54 = vld [vmem:[%s1 + $0x90] sm:$0xff]
    %v55 = vld [vmem:[%s1 + $0x98] sm:$0xff]
    %v56 = vld [vmem:[%s1 + $0xa0] sm:$0xff]
    %v57 = vld [vmem:[%s1 + $0xa8] sm:$0xff]
    %v58 = vld [vmem:[%s1 + $0xb0] sm:$0xff]
    %v59 = vld [vmem:[%s1 + $0xb8] sm:$0xff]
    %v60 = vld [vmem:[%s1 + $0xc0] sm:$0xff]
    %v61 = vld [vmem:[%s1 + $0xc8] sm:$0xff]
    %v62 = vld [vmem:[%s1 + $0xd0] sm:$0xff]
    %v63 = vld [vmem:[%s1 + $0xd8] sm:$0xff]
    %v64 = vld [vmem:[%s1 + $0xe0] sm:$0xff]
    %v65 = vld [vmem:[%s1 + $0xe8] sm:$0xff]
    %v66 = vld [vmem:[%s1 + $0xf0] sm:$0xff]
    %v67 = vld [vmem:[%s1 + $0xf8] sm:$0xff]
    %v68 = vld [vmem:[%s1 + $0x100] sm:$0xff]
    %v69 = vld [vmem:[%s1 + $0x108] sm:$0xff]
    %v70 = vld [vmem:[%s1 + $0x110] sm:$0xff]
    %v71 = vld [vmem:[%s1 + $0x118] sm:$0xff]
    %v72 = vld [vmem:[%s1 + $0x120] sm:$0xff]
    %v73 = vld [vmem:[%s1 + $0x128] sm:$0xff]
    %v74 = vld [vmem:[%s1 + $0x130] sm:$0xff]
    %v75 = vld [vmem:[%s1 + $0x138] sm:$0xff]
    %v76 = vld [vmem:[%s1 + $0x140] sm:$0xff]
    %v77 = vld [vmem:[%s1 + $0x148] sm:$0xff]
    %v78 = vld [vmem:[%s1 + $0x150] sm:$0xff]
    %v79 = vld [vmem:[%s1 + $0x158] sm:$0xff]
    %v80 = vld [vmem:[%s1 + $0x160] sm:$0xff]
    %v81 = vld [vmem:[%s1 + $0x168] sm:$0xff]
    %v82 = vld [vmem:[%s1 + $0x170] sm:$0xff]
    %v83 = vld [vmem:[%s1 + $0x178] sm:$0xff]
    %v84 = vld [vmem:[%s1 + $0x180] sm:$0xff]
    %v85 = vld [vmem:[%s1 + $0x188] sm:$0xff]
    %v86 = vld [vmem:[%s1 + $0x190] sm:$0xff]
    %v87 = vld [vmem:[%s1 + $0x198] sm:$0xff]
    %v88 = vld [vmem:[%s1 + $0x1a0] sm:$0xff]
    %v89 = vld [vmem:[%s1 + $0x1a8] sm:$0xff]
    %v90 = vld [vmem:[%s1 + $0x1b0] sm:$0xff]
    %v91 = vld [vmem:[%s1 + $0x1b8] sm:$0xff]
    %v92 = vld [vmem:[%s1 + $0x1c0] sm:$0xff]
    %v93 = vld [vmem:[%s1 + $0x1c8] sm:$0xff]
    %v94 = vld [vmem:[%s1 + $0x1d0] sm:$0xff]
    %v95 = vld [vmem:[%s1 + $0x1d8] sm:$0xff]
    %v96 = vld [vmem:[%s1 + $0x1e0] sm:$0xff]
    %v97 = vld [vmem:[%s1 + $0x1e8] sm:$0xff]
    %v98 = vld [vmem:[%s1 + $0x1f0] sm:$0xff]
    %v99 = vld [vmem:[%s1 + $0x1f8] sm:$0x3f]
    %v100 = vld [vmem:[%s2] sm:$0x1]
    %v101 = vld [vmem:[%s3] sm:$0xff]
    %v102 = vld [vmem:[%s3 + $0x8] sm:$0xff]
    %v103 = vld [vmem:[%s3 + $0x10] sm:$0xff]
    %v104 = vld [vmem:[%s3 + $0x18] sm:$0xff]
    %v105 = vld [vmem:[%s3 + $0x20] sm:$0xff]
    %v106 = vld [vmem:[%s3 + $0x28] sm:$0xff]
    %v107 = vld [vmem:[%s3 + $0x30] sm:$0xff]
    %v108 = vld [vmem:[%s3 + $0x38] sm:$0xff]
    %v109 = vld [vmem:[%s4] sm:$0xff]
    %v110 = vld [vmem:[%s4 + $0x8] sm:$0xff]
    %v111 = vld [vmem:[%s4 + $0x10] sm:$0xff]
    %v112 = vld [vmem:[%s4 + $0x18] sm:$0xff]
    %v113 = vld [vmem:[%s5] sm:$0x1]
    %v115 = vlaneseq
    %v116 = vshrl.u32 %v115, 7
    %v117 = vsub.s32 0, %v116
    %v118 = vrot.slane %v113, %v117
    %v120 = vld [vmem:[%s0] sm:$0xff]
    %v121 = vld [vmem:[%s0 + $0x8] sm:$0xff]
    %v122 = vld [vmem:[%s0 + $0x10] sm:$0xff]
    %v123 = vld [vmem:[%s0 + $0x18] sm:$0xff]
    %v125 = vlaneseq
    %v126 = vshrl.u32 %v125, 7
    %v127 = vsub.s32 0, %v126
    %v128 = vrot.slane %v100, %v127
    %vm130 = vcmask 1031168
    %v132 = vsel %vm130, %v123, 0
    %vm134 = vcmask 1045504
    %v136 = vsel %vm134, %v99, 0
    %138 = vmatprep.subr.mxu0 0.0
    %139 = vmatpush1.msra.mxu0 %v36
    %140 = vmatprep.subr.mxu0 0.0
    %141 = vmatpush1.msra.mxu0 %v37
    %142 = vmatprep.subr.mxu0 0.0
    %143 = vmatpush1.msra.mxu0 %v38
    %144 = vmatprep.subr.mxu0 0.0
    %145 = vmatpush1.msra.mxu0 %v39
    %146 = vmatprep.subr.mxu0 0.0
    %147 = vmatpush1.msra.mxu0 %v40
    %148 = vmatprep.subr.mxu0 0.0
    %149 = vmatpush1.msra.mxu0 %v41
    %150 = vmatprep.subr.mxu0 0.0
    %151 = vmatpush1.msra.mxu0 %v42
    %152 = vmatprep.subr.mxu0 0.0
    %153 = vmatpush1.msra.mxu0 %v43
    %154 = vmatprep.subr.mxu0 0.0
    %155 = vmatpush1.msra.mxu0 %v44
    %156 = vmatprep.subr.mxu0 0.0
    %157 = vmatpush1.msra.mxu0 %v45
    %158 = vmatprep.subr.mxu0 0.0
    %159 = vmatpush1.msra.mxu0 %v46
    %160 = vmatprep.subr.mxu0 0.0
    %161 = vmatpush1.msra.mxu0 %v47
    %162 = vmatprep.subr.mxu0 0.0
    %163 = vmatpush1.msra.mxu0 %v48
    %164 = vmatprep.subr.mxu0 0.0
    %165 = vmatpush1.msra.mxu0 %v49
    %166 = vmatprep.subr.mxu0 0.0
    %167 = vmatpush1.msra.mxu0 %v50
    %168 = vmatprep.subr.mxu0 0.0
    %169 = vmatpush1.msra.mxu0 %v51
    %170 = vmatprep.subr.mxu0 0.0
    %171 = vmatpush1.msra.mxu0 %v52
    %172 = vmatprep.subr.mxu0 0.0
    %173 = vmatpush1.msra.mxu0 %v53
    %174 = vmatprep.subr.mxu0 0.0
    %175 = vmatpush1.msra.mxu0 %v54
    %176 = vmatprep.subr.mxu0 0.0
    %177 = vmatpush1.msra.mxu0 %v55
    %178 = vmatprep.subr.mxu0 0.0
    %179 = vmatpush1.msra.mxu0 %v56
    %180 = vmatprep.subr.mxu0 0.0
    %181 = vmatpush1.msra.mxu0 %v57
    %182 = vmatprep.subr.mxu0 0.0
    %183 = vmatpush1.msra.mxu0 %v58
    %184 = vmatprep.subr.mxu0 0.0
    %185 = vmatpush1.msra.mxu0 %v59
    %186 = vmatprep.subr.mxu0 0.0
    %187 = vmatpush1.msra.mxu0 %v60
    %188 = vmatprep.subr.mxu0 0.0
    %189 = vmatpush1.msra.mxu0 %v61
    %190 = vmatprep.subr.mxu0 0.0
    %191 = vmatpush1.msra.mxu0 %v62
    %192 = vmatprep.subr.mxu0 0.0
    %193 = vmatpush1.msra.mxu0 %v63
    %194 = vmatprep.subr.mxu0 0.0
    %195 = vmatpush1.msra.mxu0 %v64
    %196 = vmatprep.subr.mxu0 0.0
    %197 = vmatpush1.msra.mxu0 %v65
    %198 = vmatprep.subr.mxu0 0.0
    %199 = vmatpush1.msra.mxu0 %v66
    %200 = vmatprep.subr.mxu0 0.0
    %201 = vmatpush1.msra.mxu0 %v67
    %202 = vmatprep.mubr.f32.mxu0 %v121
    %203 = vmatmul.mubr.f32.gmra.mrb[0].mxu0 %v120
    %v204 = vpop.f32.mrb[0].mxu0
    %v205 = vadd.f32 %v128, %v204
    %v206 = vpop.f32.mrb[0].mxu0
    %207 = vdwg.mxu0
    %208 = vmatprep.subr.mxu0 0.0
    %209 = vmatpush1.msra.mxu0 %v68
    %210 = vmatprep.subr.mxu0 0.0
    %211 = vmatpush1.msra.mxu0 %v69
    %212 = vmatprep.subr.mxu0 0.0
    %213 = vmatpush1.msra.mxu0 %v70
    %214 = vmatprep.subr.mxu0 0.0
    %215 = vmatpush1.msra.mxu0 %v71
    %216 = vmatprep.subr.mxu0 0.0
    %217 = vmatpush1.msra.mxu0 %v72
    %218 = vmatprep.subr.mxu0 0.0
    %219 = vmatpush1.msra.mxu0 %v73
    %220 = vmatprep.subr.mxu0 0.0
    %221 = vmatpush1.msra.mxu0 %v74
    %222 = vmatprep.subr.mxu0 0.0
    %223 = vmatpush1.msra.mxu0 %v75
    %224 = vmatprep.subr.mxu0 0.0
    %225 = vmatpush1.msra.mxu0 %v76
    %226 = vmatprep.subr.mxu0 0.0
    %227 = vmatpush1.msra.mxu0 %v77
    %228 = vmatprep.subr.mxu0 0.0
    %229 = vmatpush1.msra.mxu0 %v78
    %230 = vmatprep.subr.mxu0 0.0
    %231 = vmatpush1.msra.mxu0 %v79
    %232 = vmatprep.subr.mxu0 0.0
    %233 = vmatpush1.msra.mxu0 %v80
    %234 = vmatprep.subr.mxu0 0.0
    %235 = vmatpush1.msra.mxu0 %v81
    %236 = vmatprep.subr.mxu0 0.0
    %237 = vmatpush1.msra.mxu0 %v82
    %238 = vmatprep.subr.mxu0 0.0
    %239 = vmatpush1.msra.mxu0 %v83
    %240 = vmatprep.subr.mxu0 0.0
    %241 = vmatpush1.msra.mxu0 %v84
    %242 = vmatprep.subr.mxu0 0.0
    %243 = vmatpush1.msra.mxu0 %v85
    %244 = vmatprep.subr.mxu0 0.0
    %245 = vmatpush1.msra.mxu0 %v86
    %246 = vmatprep.subr.mxu0 0.0
    %247 = vmatpush1.msra.mxu0 %v87
    %248 = vmatprep.subr.mxu0 0.0
    %249 = vmatpush1.msra.mxu0 %v88
    %250 = vmatprep.subr.mxu0 0.0
    %251 = vmatpush1.msra.mxu0 %v89
    %252 = vmatprep.subr.mxu0 0.0
    %253 = vmatpush1.msra.mxu0 %v90
    %254 = vmatprep.subr.mxu0 0.0
    %255 = vmatpush1.msra.mxu0 %v91
    %256 = vmatprep.subr.mxu0 0.0
    %257 = vmatpush1.msra.mxu0 %v92
    %258 = vmatprep.subr.mxu0 0.0
    %259 = vmatpush1.msra.mxu0 %v93
    %260 = vmatprep.subr.mxu0 0.0
    %261 = vmatpush1.msra.mxu0 %v94
    %262 = vmatprep.subr.mxu0 0.0
    %263 = vmatpush1.msra.mxu0 %v95
    %264 = vmatprep.subr.mxu0 0.0
    %265 = vmatpush1.msra.mxu0 %v96
    %266 = vmatprep.subr.mxu0 0.0
    %267 = vmatpush1.msra.mxu0 %v97
    %268 = vmatprep.subr.mxu0 0.0
    %269 = vmatpush1.msra.mxu0 %v98
    %270 = vmatprep.subr.mxu0 0.0
    %271 = vmatpush1.msra.mxu0 %v136
    %272 = vmatprep.mubr.f32.mxu0 %v132
    %273 = vmatmul.mubr.f32.gmra.mrb[0].mxu0 %v122
    %v274 = vpop.f32.mrb[0].mxu0
    %v275 = vadd.f32 %v205, %v274
    %v276 = vpop.f32.mrb[0].mxu0
    %277 = vdwg.mxu0
    %s278 = scalar_lea.vmem %s0, 32
    %v279 = vld [vmem:[%s278] sm:$0xff]
    %v280 = vld [vmem:[%s278 + $0x8] sm:$0xff]
    %v281 = vld [vmem:[%s278 + $0x10] sm:$0xff]
    %v282 = vld [vmem:[%s278 + $0x18] sm:$0xff]
    %v284 = vsel %vm130, %v282, 0
    %286 = vmatprep.subr.mxu0 0.0
    %287 = vmatpush1.msra.mxu0 %v36
    %288 = vmatprep.subr.mxu0 0.0
    %289 = vmatpush1.msra.mxu0 %v37
    %290 = vmatprep.subr.mxu0 0.0
    %291 = vmatpush1.msra.mxu0 %v38
    %292 = vmatprep.subr.mxu0 0.0
    %293 = vmatpush1.msra.mxu0 %v39
    %294 = vmatprep.subr.mxu0 0.0
    %295 = vmatpush1.msra.mxu0 %v40
    %296 = vmatprep.subr.mxu0 0.0
    %297 = vmatpush1.msra.mxu0 %v41
    %298 = vmatprep.subr.mxu0 0.0
    %299 = vmatpush1.msra.mxu0 %v42
    %300 = vmatprep.subr.mxu0 0.0
    %301 = vmatpush1.msra.mxu0 %v43
    %302 = vmatprep.subr.mxu0 0.0
    %303 = vmatpush1.msra.mxu0 %v44
    %304 = vmatprep.subr.mxu0 0.0
    %305 = vmatpush1.msra.mxu0 %v45
    %306 = vmatprep.subr.mxu0 0.0
    %307 = vmatpush1.msra.mxu0 %v46
    %308 = vmatprep.subr.mxu0 0.0
    %309 = vmatpush1.msra.mxu0 %v47
    %310 = vmatprep.subr.mxu0 0.0
    %311 = vmatpush1.msra.mxu0 %v48
    %312 = vmatprep.subr.mxu0 0.0
    %313 = vmatpush1.msra.mxu0 %v49
    %314 = vmatprep.subr.mxu0 0.0
    %315 = vmatpush1.msra.mxu0 %v50
    %316 = vmatprep.subr.mxu0 0.0
    %317 = vmatpush1.msra.mxu0 %v51
    %318 = vmatprep.subr.mxu0 0.0
    %319 = vmatpush1.msra.mxu0 %v52
    %320 = vmatprep.subr.mxu0 0.0
    %321 = vmatpush1.msra.mxu0 %v53
    %322 = vmatprep.subr.mxu0 0.0
    %323 = vmatpush1.msra.mxu0 %v54
    %324 = vmatprep.subr.mxu0 0.0
    %325 = vmatpush1.msra.mxu0 %v55
    %326 = vmatprep.subr.mxu0 0.0
    %327 = vmatpush1.msra.mxu0 %v56
    %328 = vmatprep.subr.mxu0 0.0
    %329 = vmatpush1.msra.mxu0 %v57
    %330 = vmatprep.subr.mxu0 0.0
    %331 = vmatpush1.msra.mxu0 %v58
    %332 = vmatprep.subr.mxu0 0.0
    %333 = vmatpush1.msra.mxu0 %v59
    %334 = vmatprep.subr.mxu0 0.0
    %335 = vmatpush1.msra.mxu0 %v60
    %336 = vmatprep.subr.mxu0 0.0
    %337 = vmatpush1.msra.mxu0 %v61
    %338 = vmatprep.subr.mxu0 0.0
    %339 = vmatpush1.msra.mxu0 %v62
    %340 = vmatprep.subr.mxu0 0.0
    %341 = vmatpush1.msra.mxu0 %v63
    %342 = vmatprep.subr.mxu0 0.0
    %343 = vmatpush1.msra.mxu0 %v64
    %344 = vmatprep.subr.mxu0 0.0
    %345 = vmatpush1.msra.mxu0 %v65
    %346 = vmatprep.subr.mxu0 0.0
    %347 = vmatpush1.msra.mxu0 %v66
    %348 = vmatprep.subr.mxu0 0.0
    %349 = vmatpush1.msra.mxu0 %v67
    %350 = vmatprep.mubr.f32.mxu0 %v280
    %351 = vmatmul.mubr.f32.gmra.mrb[0].mxu0 %v279
    %v352 = vpop.f32.mrb[0].mxu0
    %v353 = vadd.f32 %v128, %v352
    %v354 = vpop.f32.mrb[0].mxu0
    %355 = vdwg.mxu0
    %356 = vmatprep.subr.mxu0 0.0
    %357 = vmatpush1.msra.mxu0 %v68
    %358 = vmatprep.subr.mxu0 0.0
    %359 = vmatpush1.msra.mxu0 %v69
    %360 = vmatprep.subr.mxu0 0.0
    %361 = vmatpush1.msra.mxu0 %v70
    %362 = vmatprep.subr.mxu0 0.0
    %363 = vmatpush1.msra.mxu0 %v71
    %364 = vmatprep.subr.mxu0 0.0
    %365 = vmatpush1.msra.mxu0 %v72
    %366 = vmatprep.subr.mxu0 0.0
    %367 = vmatpush1.msra.mxu0 %v73
    %368 = vmatprep.subr.mxu0 0.0
    %369 = vmatpush1.msra.mxu0 %v74
    %370 = vmatprep.subr.mxu0 0.0
    %371 = vmatpush1.msra.mxu0 %v75
    %372 = vmatprep.subr.mxu0 0.0
    %373 = vmatpush1.msra.mxu0 %v76
    %374 = vmatprep.subr.mxu0 0.0
    %375 = vmatpush1.msra.mxu0 %v77
    %376 = vmatprep.subr.mxu0 0.0
    %377 = vmatpush1.msra.mxu0 %v78
    %378 = vmatprep.subr.mxu0 0.0
    %379 = vmatpush1.msra.mxu0 %v79
    %380 = vmatprep.subr.mxu0 0.0
    %381 = vmatpush1.msra.mxu0 %v80
    %382 = vmatprep.subr.mxu0 0.0
    %383 = vmatpush1.msra.mxu0 %v81
    %384 = vmatprep.subr.mxu0 0.0
    %385 = vmatpush1.msra.mxu0 %v82
    %386 = vmatprep.subr.mxu0 0.0
    %387 = vmatpush1.msra.mxu0 %v83
    %388 = vmatprep.subr.mxu0 0.0
    %389 = vmatpush1.msra.mxu0 %v84
    %390 = vmatprep.subr.mxu0 0.0
    %391 = vmatpush1.msra.mxu0 %v85
    %392 = vmatprep.subr.mxu0 0.0
    %393 = vmatpush1.msra.mxu0 %v86
    %394 = vmatprep.subr.mxu0 0.0
    %395 = vmatpush1.msra.mxu0 %v87
    %396 = vmatprep.subr.mxu0 0.0
    %397 = vmatpush1.msra.mxu0 %v88
    %398 = vmatprep.subr.mxu0 0.0
    %399 = vmatpush1.msra.mxu0 %v89
    %400 = vmatprep.subr.mxu0 0.0
    %401 = vmatpush1.msra.mxu0 %v90
    %402 = vmatprep.subr.mxu0 0.0
    %403 = vmatpush1.msra.mxu0 %v91
    %404 = vmatprep.subr.mxu0 0.0
    %405 = vmatpush1.msra.mxu0 %v92
    %406 = vmatprep.subr.mxu0 0.0
    %407 = vmatpush1.msra.mxu0 %v93
    %408 = vmatprep.subr.mxu0 0.0
    %409 = vmatpush1.msra.mxu0 %v94
    %410 = vmatprep.subr.mxu0 0.0
    %411 = vmatpush1.msra.mxu0 %v95
    %412 = vmatprep.subr.mxu0 0.0
    %413 = vmatpush1.msra.mxu0 %v96
    %414 = vmatprep.subr.mxu0 0.0
    %415 = vmatpush1.msra.mxu0 %v97
    %416 = vmatprep.subr.mxu0 0.0
    %417 = vmatpush1.msra.mxu0 %v98
    %418 = vmatprep.subr.mxu0 0.0
    %419 = vmatpush1.msra.mxu0 %v136
    %420 = vmatprep.mubr.f32.mxu0 %v284
    %421 = vmatmul.mubr.f32.gmra.mrb[0].mxu0 %v281
    %v422 = vpop.f32.mrb[0].mxu0
    %v423 = vadd.f32 %v353, %v422
    %v424 = vpop.f32.mrb[0].mxu0
    %425 = vdwg.mxu0
    %v427 = vrot.slane %v423, 7
    %vm429 = vcmask 1040384
    %v430 = vsel %vm429, %v275, %v427
    %vm431 = vcmask 523264
    %v433 = vsel %vm431, 0.0, 0
    %435 = vmatprep.subr.mxu0 0.0
    %436 = vmatpush1.msra.mxu0 %v101
    %437 = vmatprep.subr.mxu0 0.0
    %438 = vmatpush1.msra.mxu0 %v102
    %439 = vmatprep.subr.mxu0 0.0
    %440 = vmatpush1.msra.mxu0 %v103
    %441 = vmatprep.subr.mxu0 0.0
    %442 = vmatpush1.msra.mxu0 %v104
    %443 = vmatprep.subr.mxu0 0.0
    %444 = vmatpush1.msra.mxu0 %v105
    %445 = vmatprep.subr.mxu0 0.0
    %446 = vmatpush1.msra.mxu0 %v106
    %447 = vmatprep.subr.mxu0 0.0
    %448 = vmatpush1.msra.mxu0 %v107
    %449 = vmatprep.subr.mxu0 0.0
    %450 = vmatpush1.msra.mxu0 %v108
    %451 = vmatprep.subr.mxu0 0.0
    %452 = vmatpush1.msra.mxu0 0.0
    %453 = vmatprep.subr.mxu0 0.0
    %454 = vmatpush1.msra.mxu0 0.0
    %455 = vmatprep.subr.mxu0 0.0
    %456 = vmatpush1.msra.mxu0 0.0
    %457 = vmatprep.subr.mxu0 0.0
    %458 = vmatpush1.msra.mxu0 0.0
    %459 = vmatprep.subr.mxu0 0.0
    %460 = vmatpush1.msra.mxu0 0.0
    %461 = vmatprep.subr.mxu0 0.0
    %462 = vmatpush1.msra.mxu0 0.0
    %463 = vmatprep.subr.mxu0 0.0
    %464 = vmatpush1.msra.mxu0 0.0
    %465 = vmatprep.subr.mxu0 0.0
    %466 = vmatpush1.msra.mxu0 0.0
    %467 = vmatprep.subr.mxu0 0.0
    %468 = vmatpush1.msra.mxu0 0.0
    %469 = vmatprep.subr.mxu0 0.0
    %470 = vmatpush1.msra.mxu0 0.0
    %471 = vmatprep.subr.mxu0 0.0
    %472 = vmatpush1.msra.mxu0 0.0
    %473 = vmatprep.subr.mxu0 0.0
    %474 = vmatpush1.msra.mxu0 0.0
    %475 = vmatprep.subr.mxu0 0.0
    %476 = vmatpush1.msra.mxu0 0.0
    %477 = vmatprep.subr.mxu0 0.0
    %478 = vmatpush1.msra.mxu0 0.0
    %479 = vmatprep.subr.mxu0 0.0
    %480 = vmatpush1.msra.mxu0 0.0
    %481 = vmatprep.subr.mxu0 0.0
    %482 = vmatpush1.msra.mxu0 0.0
    %483 = vmatprep.subr.mxu0 0.0
    %484 = vmatpush1.msra.mxu0 0.0
    %485 = vmatprep.subr.mxu0 0.0
    %486 = vmatpush1.msra.mxu0 0.0
    %487 = vmatprep.subr.mxu0 0.0
    %488 = vmatpush1.msra.mxu0 0.0
    %489 = vmatprep.subr.mxu0 0.0
    %490 = vmatpush1.msra.mxu0 0.0
    %491 = vmatprep.subr.mxu0 0.0
    %492 = vmatpush1.msra.mxu0 0.0
    %493 = vmatprep.subr.mxu0 0.0
    %494 = vmatpush1.msra.mxu0 0.0
    %495 = vmatprep.subr.mxu0 0.0
    %496 = vmatpush1.msra.mxu0 0.0
    %497 = vmatprep.subr.mxu0 0.0
    %498 = vmatpush1.msra.mxu0 0.0
    %499 = vmatprep.mubr.f32.mxu0 0.0
    %500 = vmatmul.mubr.f32.gmra.mrb[0].mxu0 %v433
    %v501 = vpop.f32.mrb[0].mxu0
    %v502 = vadd.f32 0.0, %v501
    %v503 = vpop.f32.mrb[0].mxu0
    %504 = vdwg.mxu0
    %v505 = vadd.f32 %v430, %v502
    %v506 = vtanh.pop %v505
    %508 = vrot.lane.b32.xlu0 %v502, 96
    %v509 = vpop.permute.xlu0 %508
    %vm511 = vcmask 261120
    %v513 = vsel %vm511, %v506, 0
    %515 = vmatprep.subr.mxu0 0.0
    %516 = vmatpush1.msra.mxu0 %v109
    %517 = vmatprep.subr.mxu0 0.0
    %518 = vmatpush1.msra.mxu0 %v110
    %519 = vmatprep.subr.mxu0 0.0
    %520 = vmatpush1.msra.mxu0 %v111
    %521 = vmatprep.subr.mxu0 0.0
    %522 = vmatpush1.msra.mxu0 %v112
    %523 = vmatprep.subr.mxu0 0.0
    %524 = vmatpush1.msra.mxu0 0.0
    %525 = vmatprep.subr.mxu0 0.0
    %526 = vmatpush1.msra.mxu0 0.0
    %527 = vmatprep.subr.mxu0 0.0
    %528 = vmatpush1.msra.mxu0 0.0
    %529 = vmatprep.subr.mxu0 0.0
    %530 = vmatpush1.msra.mxu0 0.0
    %531 = vmatprep.subr.mxu0 0.0
    %532 = vmatpush1.msra.mxu0 0.0
    %533 = vmatprep.subr.mxu0 0.0
    %534 = vmatpush1.msra.mxu0 0.0
    %535 = vmatprep.subr.mxu0 0.0
    %536 = vmatpush1.msra.mxu0 0.0
    %537 = vmatprep.subr.mxu0 0.0
    %538 = vmatpush1.msra.mxu0 0.0
    %539 = vmatprep.subr.mxu0 0.0
    %540 = vmatpush1.msra.mxu0 0.0
    %541 = vmatprep.subr.mxu0 0.0
    %542 = vmatpush1.msra.mxu0 0.0
    %543 = vmatprep.subr.mxu0 0.0
    %544 = vmatpush1.msra.mxu0 0.0
    %545 = vmatprep.subr.mxu0 0.0
    %546 = vmatpush1.msra.mxu0 0.0
    %547 = vmatprep.subr.mxu0 0.0
    %548 = vmatpush1.msra.mxu0 0.0
    %549 = vmatprep.subr.mxu0 0.0
    %550 = vmatpush1.msra.mxu0 0.0
    %551 = vmatprep.subr.mxu0 0.0
    %552 = vmatpush1.msra.mxu0 0.0
    %553 = vmatprep.subr.mxu0 0.0
    %554 = vmatpush1.msra.mxu0 0.0
    %555 = vmatprep.subr.mxu0 0.0
    %556 = vmatpush1.msra.mxu0 0.0
    %557 = vmatprep.subr.mxu0 0.0
    %558 = vmatpush1.msra.mxu0 0.0
    %559 = vmatprep.subr.mxu0 0.0
    %560 = vmatpush1.msra.mxu0 0.0
    %561 = vmatprep.subr.mxu0 0.0
    %562 = vmatpush1.msra.mxu0 0.0
    %563 = vmatprep.subr.mxu0 0.0
    %564 = vmatpush1.msra.mxu0 0.0
    %565 = vmatprep.subr.mxu0 0.0
    %566 = vmatpush1.msra.mxu0 0.0
    %567 = vmatprep.subr.mxu0 0.0
    %568 = vmatpush1.msra.mxu0 0.0
    %569 = vmatprep.subr.mxu0 0.0
    %570 = vmatpush1.msra.mxu0 0.0
    %571 = vmatprep.subr.mxu0 0.0
    %572 = vmatpush1.msra.mxu0 0.0
    %573 = vmatprep.subr.mxu0 0.0
    %574 = vmatpush1.msra.mxu0 0.0
    %575 = vmatprep.subr.mxu0 0.0
    %576 = vmatpush1.msra.mxu0 0.0
    %577 = vmatprep.subr.mxu0 0.0
    %578 = vmatpush1.msra.mxu0 0.0
    %579 = vmatprep.mubr.f32.mxu0 0.0
    %580 = vmatmul.mubr.f32.gmra.mrb[0].mxu0 %v513
    %v581 = vpop.f32.mrb[0].mxu0
    %v582 = vadd.f32 %v509, %v581
    %v583 = vpop.f32.mrb[0].mxu0
    %584 = vdwg.mxu0
    %v585 = vadd.f32 %v582, %v118
    %v586 = vtanh.pop %v585
    %588 = vrot.lane.b32.xlu0 %v586, 32
    %v589 = vpop.permute.xlu0 %588
    %v591 = vsel %vm511, %v506, %v589
    %v593 = vrot.slane %v275, 1
    %v595 = vsel %vm429, %v593, %v423
    %v597 = vsel %vm431, %v591, 0
    %599 = vmatprep.subr.mxu0 0.0
    %600 = vmatpush1.msra.mxu0 %v101
    %601 = vmatprep.subr.mxu0 0.0
    %602 = vmatpush1.msra.mxu0 %v102
    %603 = vmatprep.subr.mxu0 0.0
    %604 = vmatpush1.msra.mxu0 %v103
    %605 = vmatprep.subr.mxu0 0.0
    %606 = vmatpush1.msra.mxu0 %v104
    %607 = vmatprep.subr.mxu0 0.0
    %608 = vmatpush1.msra.mxu0 %v105
    %609 = vmatprep.subr.mxu0 0.0
    %610 = vmatpush1.msra.mxu0 %v106
    %611 = vmatprep.subr.mxu0 0.0
    %612 = vmatpush1.msra.mxu0 %v107
    %613 = vmatprep.subr.mxu0 0.0
    %614 = vmatpush1.msra.mxu0 %v108
    %615 = vmatprep.subr.mxu0 0.0
    %616 = vmatpush1.msra.mxu0 0.0
    %617 = vmatprep.subr.mxu0 0.0
    %618 = vmatpush1.msra.mxu0 0.0
    %619 = vmatprep.subr.mxu0 0.0
    %620 = vmatpush1.msra.mxu0 0.0
    %621 = vmatprep.subr.mxu0 0.0
    %622 = vmatpush1.msra.mxu0 0.0
    %623 = vmatprep.subr.mxu0 0.0
    %624 = vmatpush1.msra.mxu0 0.0
    %625 = vmatprep.subr.mxu0 0.0
    %626 = vmatpush1.msra.mxu0 0.0
    %627 = vmatprep.subr.mxu0 0.0
    %628 = vmatpush1.msra.mxu0 0.0
    %629 = vmatprep.subr.mxu0 0.0
    %630 = vmatpush1.msra.mxu0 0.0
    %631 = vmatprep.subr.mxu0 0.0
    %632 = vmatpush1.msra.mxu0 0.0
    %633 = vmatprep.subr.mxu0 0.0
    %634 = vmatpush1.msra.mxu0 0.0
    %635 = vmatprep.subr.mxu0 0.0
    %636 = vmatpush1.msra.mxu0 0.0
    %637 = vmatprep.subr.mxu0 0.0
    %638 = vmatpush1.msra.mxu0 0.0
    %639 = vmatprep.subr.mxu0 0.0
    %640 = vmatpush1.msra.mxu0 0.0
    %641 = vmatprep.subr.mxu0 0.0
    %642 = vmatpush1.msra.mxu0 0.0
    %643 = vmatprep.subr.mxu0 0.0
    %644 = vmatpush1.msra.mxu0 0.0
    %645 = vmatprep.subr.mxu0 0.0
    %646 = vmatpush1.msra.mxu0 0.0
    %647 = vmatprep.subr.mxu0 0.0
    %648 = vmatpush1.msra.mxu0 0.0
    %649 = vmatprep.subr.mxu0 0.0
    %650 = vmatpush1.msra.mxu0 0.0
    %651 = vmatprep.subr.mxu0 0.0
    %652 = vmatpush1.msra.mxu0 0.0
    %653 = vmatprep.subr.mxu0 0.0
    %654 = vmatpush1.msra.mxu0 0.0
    %655 = vmatprep.subr.mxu0 0.0
    %656 = vmatpush1.msra.mxu0 0.0
    %657 = vmatprep.subr.mxu0 0.0
    %658 = vmatpush1.msra.mxu0 0.0
    %659 = vmatprep.subr.mxu0 0.0
    %660 = vmatpush1.msra.mxu0 0.0
    %661 = vmatprep.subr.mxu0 0.0
    %662 = vmatpush1.msra.mxu0 0.0
    %663 = vmatprep.mubr.f32.mxu0 0.0
    %664 = vmatmul.mubr.f32.gmra.mrb[0].mxu0 %v597
    %v665 = vpop.f32.mrb[0].mxu0
    %v666 = vadd.f32 0.0, %v665
    %v667 = vpop.f32.mrb[0].mxu0
    %668 = vdwg.mxu0
    %v669 = vadd.f32 %v595, %v666
    %v670 = vtanh.pop %v669
    %672 = vrot.lane.b32.xlu0 %v666, 96
    %v673 = vpop.permute.xlu0 %672
    %v676 = vsel %vm511, %v670, 0
    %678 = vmatprep.subr.mxu0 0.0
    %679 = vmatpush1.msra.mxu0 %v109
    %680 = vmatprep.subr.mxu0 0.0
    %681 = vmatpush1.msra.mxu0 %v110
    %682 = vmatprep.subr.mxu0 0.0
    %683 = vmatpush1.msra.mxu0 %v111
    %684 = vmatprep.subr.mxu0 0.0
    %685 = vmatpush1.msra.mxu0 %v112
    %686 = vmatprep.subr.mxu0 0.0
    %687 = vmatpush1.msra.mxu0 0.0
    %688 = vmatprep.subr.mxu0 0.0
    %689 = vmatpush1.msra.mxu0 0.0
    %690 = vmatprep.subr.mxu0 0.0
    %691 = vmatpush1.msra.mxu0 0.0
    %692 = vmatprep.subr.mxu0 0.0
    %693 = vmatpush1.msra.mxu0 0.0
    %694 = vmatprep.subr.mxu0 0.0
    %695 = vmatpush1.msra.mxu0 0.0
    %696 = vmatprep.subr.mxu0 0.0
    %697 = vmatpush1.msra.mxu0 0.0
    %698 = vmatprep.subr.mxu0 0.0
    %699 = vmatpush1.msra.mxu0 0.0
    %700 = vmatprep.subr.mxu0 0.0
    %701 = vmatpush1.msra.mxu0 0.0
    %702 = vmatprep.subr.mxu0 0.0
    %703 = vmatpush1.msra.mxu0 0.0
    %704 = vmatprep.subr.mxu0 0.0
    %705 = vmatpush1.msra.mxu0 0.0
    %706 = vmatprep.subr.mxu0 0.0
    %707 = vmatpush1.msra.mxu0 0.0
    %708 = vmatprep.subr.mxu0 0.0
    %709 = vmatpush1.msra.mxu0 0.0
    %710 = vmatprep.subr.mxu0 0.0
    %711 = vmatpush1.msra.mxu0 0.0
    %712 = vmatprep.subr.mxu0 0.0
    %713 = vmatpush1.msra.mxu0 0.0
    %714 = vmatprep.subr.mxu0 0.0
    %715 = vmatpush1.msra.mxu0 0.0
    %716 = vmatprep.subr.mxu0 0.0
    %717 = vmatpush1.msra.mxu0 0.0
    %718 = vmatprep.subr.mxu0 0.0
    %719 = vmatpush1.msra.mxu0 0.0
    %720 = vmatprep.subr.mxu0 0.0
    %721 = vmatpush1.msra.mxu0 0.0
    %722 = vmatprep.subr.mxu0 0.0
    %723 = vmatpush1.msra.mxu0 0.0
    %724 = vmatprep.subr.mxu0 0.0
    %725 = vmatpush1.msra.mxu0 0.0
    %726 = vmatprep.subr.mxu0 0.0
    %727 = vmatpush1.msra.mxu0 0.0
    %728 = vmatprep.subr.mxu0 0.0
    %729 = vmatpush1.msra.mxu0 0.0
    %730 = vmatprep.subr.mxu0 0.0
    %731 = vmatpush1.msra.mxu0 0.0
    %732 = vmatprep.subr.mxu0 0.0
    %733 = vmatpush1.msra.mxu0 0.0
    %734 = vmatprep.subr.mxu0 0.0
    %735 = vmatpush1.msra.mxu0 0.0
    %736 = vmatprep.subr.mxu0 0.0
    %737 = vmatpush1.msra.mxu0 0.0
    %738 = vmatprep.subr.mxu0 0.0
    %739 = vmatpush1.msra.mxu0 0.0
    %740 = vmatprep.subr.mxu0 0.0
    %741 = vmatpush1.msra.mxu0 0.0
    %742 = vmatprep.mubr.f32.mxu0 0.0
    %743 = vmatmul.mubr.f32.gmra.mrb[0].mxu0 %v676
    %v744 = vpop.f32.mrb[0].mxu0
    %v745 = vadd.f32 %v673, %v744
    %v746 = vpop.f32.mrb[0].mxu0
    %747 = vdwg.mxu0
    %v748 = vadd.f32 %v745, %v118
    %v749 = vtanh.pop %v748
    %751 = vrot.lane.b32.xlu0 %v749, 32
    %v752 = vpop.permute.xlu0 %751
    %v754 = vsel %vm511, %v670, %v752
    %v755 = vrot.slane %v275, 2
    %v757 = vrot.slane %v423, 1
    %v759 = vsel %vm429, %v755, %v757
    %v761 = vsel %vm431, %v754, 0
    %763 = vmatprep.subr.mxu0 0.0
    %764 = vmatpush1.msra.mxu0 %v101
    %765 = vmatprep.subr.mxu0 0.0
    %766 = vmatpush1.msra.mxu0 %v102
    %767 = vmatprep.subr.mxu0 0.0
    %768 = vmatpush1.msra.mxu0 %v103
    %769 = vmatprep.subr.mxu0 0.0
    %770 = vmatpush1.msra.mxu0 %v104
    %771 = vmatprep.subr.mxu0 0.0
    %772 = vmatpush1.msra.mxu0 %v105
    %773 = vmatprep.subr.mxu0 0.0
    %774 = vmatpush1.msra.mxu0 %v106
    %775 = vmatprep.subr.mxu0 0.0
    %776 = vmatpush1.msra.mxu0 %v107
    %777 = vmatprep.subr.mxu0 0.0
    %778 = vmatpush1.msra.mxu0 %v108
    %779 = vmatprep.subr.mxu0 0.0
    %780 = vmatpush1.msra.mxu0 0.0
    %781 = vmatprep.subr.mxu0 0.0
    %782 = vmatpush1.msra.mxu0 0.0
    %783 = vmatprep.subr.mxu0 0.0
    %784 = vmatpush1.msra.mxu0 0.0
    %785 = vmatprep.subr.mxu0 0.0
    %786 = vmatpush1.msra.mxu0 0.0
    %787 = vmatprep.subr.mxu0 0.0
    %788 = vmatpush1.msra.mxu0 0.0
    %789 = vmatprep.subr.mxu0 0.0
    %790 = vmatpush1.msra.mxu0 0.0
    %791 = vmatprep.subr.mxu0 0.0
    %792 = vmatpush1.msra.mxu0 0.0
    %793 = vmatprep.subr.mxu0 0.0
    %794 = vmatpush1.msra.mxu0 0.0
    %795 = vmatprep.subr.mxu0 0.0
    %796 = vmatpush1.msra.mxu0 0.0
    %797 = vmatprep.subr.mxu0 0.0
    %798 = vmatpush1.msra.mxu0 0.0
    %799 = vmatprep.subr.mxu0 0.0
    %800 = vmatpush1.msra.mxu0 0.0
    %801 = vmatprep.subr.mxu0 0.0
    %802 = vmatpush1.msra.mxu0 0.0
    %803 = vmatprep.subr.mxu0 0.0
    %804 = vmatpush1.msra.mxu0 0.0
    %805 = vmatprep.subr.mxu0 0.0
    %806 = vmatpush1.msra.mxu0 0.0
    %807 = vmatprep.subr.mxu0 0.0
    %808 = vmatpush1.msra.mxu0 0.0
    %809 = vmatprep.subr.mxu0 0.0
    %810 = vmatpush1.msra.mxu0 0.0
    %811 = vmatprep.subr.mxu0 0.0
    %812 = vmatpush1.msra.mxu0 0.0
    %813 = vmatprep.subr.mxu0 0.0
    %814 = vmatpush1.msra.mxu0 0.0
    %815 = vmatprep.subr.mxu0 0.0
    %816 = vmatpush1.msra.mxu0 0.0
    %817 = vmatprep.subr.mxu0 0.0
    %818 = vmatpush1.msra.mxu0 0.0
    %819 = vmatprep.subr.mxu0 0.0
    %820 = vmatpush1.msra.mxu0 0.0
    %821 = vmatprep.subr.mxu0 0.0
    %822 = vmatpush1.msra.mxu0 0.0
    %823 = vmatprep.subr.mxu0 0.0
    %824 = vmatpush1.msra.mxu0 0.0
    %825 = vmatprep.subr.mxu0 0.0
    %826 = vmatpush1.msra.mxu0 0.0
    %827 = vmatprep.mubr.f32.mxu0 0.0
    %828 = vmatmul.mubr.f32.gmra.mrb[0].mxu0 %v761
    %v829 = vpop.f32.mrb[0].mxu0
    %v830 = vadd.f32 0.0, %v829
    %v831 = vpop.f32.mrb[0].mxu0
    %832 = vdwg.mxu0
    %v833 = vadd.f32 %v759, %v830
    %v834 = vtanh.pop %v833
    %836 = vrot.lane.b32.xlu0 %v830, 96
    %v837 = vpop.permute.xlu0 %836
    %v840 = vsel %vm511, %v834, 0
    %842 = vmatprep.subr.mxu0 0.0
    %843 = vmatpush1.msra.mxu0 %v109
    %844 = vmatprep.subr.mxu0 0.0
    %845 = vmatpush1.msra.mxu0 %v110
    %846 = vmatprep.subr.mxu0 0.0
    %847 = vmatpush1.msra.mxu0 %v111
    %848 = vmatprep.subr.mxu0 0.0
    %849 = vmatpush1.msra.mxu0 %v112
    %850 = vmatprep.subr.mxu0 0.0
    %851 = vmatpush1.msra.mxu0 0.0
    %852 = vmatprep.subr.mxu0 0.0
    %853 = vmatpush1.msra.mxu0 0.0
    %854 = vmatprep.subr.mxu0 0.0
    %855 = vmatpush1.msra.mxu0 0.0
    %856 = vmatprep.subr.mxu0 0.0
    %857 = vmatpush1.msra.mxu0 0.0
    %858 = vmatprep.subr.mxu0 0.0
    %859 = vmatpush1.msra.mxu0 0.0
    %860 = vmatprep.subr.mxu0 0.0
    %861 = vmatpush1.msra.mxu0 0.0
    %862 = vmatprep.subr.mxu0 0.0
    %863 = vmatpush1.msra.mxu0 0.0
    %864 = vmatprep.subr.mxu0 0.0
    %865 = vmatpush1.msra.mxu0 0.0
    %866 = vmatprep.subr.mxu0 0.0
    %867 = vmatpush1.msra.mxu0 0.0
    %868 = vmatprep.subr.mxu0 0.0
    %869 = vmatpush1.msra.mxu0 0.0
    %870 = vmatprep.subr.mxu0 0.0
    %871 = vmatpush1.msra.mxu0 0.0
    %872 = vmatprep.subr.mxu0 0.0
    %873 = vmatpush1.msra.mxu0 0.0
    %874 = vmatprep.subr.mxu0 0.0
    %875 = vmatpush1.msra.mxu0 0.0
    %876 = vmatprep.subr.mxu0 0.0
    %877 = vmatpush1.msra.mxu0 0.0
    %878 = vmatprep.subr.mxu0 0.0
    %879 = vmatpush1.msra.mxu0 0.0
    %880 = vmatprep.subr.mxu0 0.0
    %881 = vmatpush1.msra.mxu0 0.0
    %882 = vmatprep.subr.mxu0 0.0
    %883 = vmatpush1.msra.mxu0 0.0
    %884 = vmatprep.subr.mxu0 0.0
    %885 = vmatpush1.msra.mxu0 0.0
    %886 = vmatprep.subr.mxu0 0.0
    %887 = vmatpush1.msra.mxu0 0.0
    %888 = vmatprep.subr.mxu0 0.0
    %889 = vmatpush1.msra.mxu0 0.0
    %890 = vmatprep.subr.mxu0 0.0
    %891 = vmatpush1.msra.mxu0 0.0
    %892 = vmatprep.subr.mxu0 0.0
    %893 = vmatpush1.msra.mxu0 0.0
    %894 = vmatprep.subr.mxu0 0.0
    %895 = vmatpush1.msra.mxu0 0.0
    %896 = vmatprep.subr.mxu0 0.0
    %897 = vmatpush1.msra.mxu0 0.0
    %898 = vmatprep.subr.mxu0 0.0
    %899 = vmatpush1.msra.mxu0 0.0
    %900 = vmatprep.subr.mxu0 0.0
    %901 = vmatpush1.msra.mxu0 0.0
    %902 = vmatprep.subr.mxu0 0.0
    %903 = vmatpush1.msra.mxu0 0.0
    %904 = vmatprep.subr.mxu0 0.0
    %905 = vmatpush1.msra.mxu0 0.0
    %906 = vmatprep.mubr.f32.mxu0 0.0
    %907 = vmatmul.mubr.f32.gmra.mrb[0].mxu0 %v840
    %v908 = vpop.f32.mrb[0].mxu0
    %v909 = vadd.f32 %v837, %v908
    %v910 = vpop.f32.mrb[0].mxu0
    %911 = vdwg.mxu0
    %v912 = vadd.f32 %v909, %v118
    %v913 = vtanh.pop %v912
    %915 = vrot.lane.b32.xlu0 %v913, 32
    %v916 = vpop.permute.xlu0 %915
    %v918 = vsel %vm511, %v834, %v916
    %v919 = vrot.slane %v275, 3
    %v921 = vrot.slane %v423, 2
    %v923 = vsel %vm429, %v919, %v921
    %v925 = vsel %vm431, %v918, 0
    %927 = vmatprep.subr.mxu0 0.0
    %928 = vmatpush1.msra.mxu0 %v101
    %929 = vmatprep.subr.mxu0 0.0
    %930 = vmatpush1.msra.mxu0 %v102
    %931 = vmatprep.subr.mxu0 0.0
    %932 = vmatpush1.msra.mxu0 %v103
    %933 = vmatprep.subr.mxu0 0.0
    %934 = vmatpush1.msra.mxu0 %v104
    %935 = vmatprep.subr.mxu0 0.0
    %936 = vmatpush1.msra.mxu0 %v105
    %937 = vmatprep.subr.mxu0 0.0
    %938 = vmatpush1.msra.mxu0 %v106
    %939 = vmatprep.subr.mxu0 0.0
    %940 = vmatpush1.msra.mxu0 %v107
    %941 = vmatprep.subr.mxu0 0.0
    %942 = vmatpush1.msra.mxu0 %v108
    %943 = vmatprep.subr.mxu0 0.0
    %944 = vmatpush1.msra.mxu0 0.0
    %945 = vmatprep.subr.mxu0 0.0
    %946 = vmatpush1.msra.mxu0 0.0
    %947 = vmatprep.subr.mxu0 0.0
    %948 = vmatpush1.msra.mxu0 0.0
    %949 = vmatprep.subr.mxu0 0.0
    %950 = vmatpush1.msra.mxu0 0.0
    %951 = vmatprep.subr.mxu0 0.0
    %952 = vmatpush1.msra.mxu0 0.0
    %953 = vmatprep.subr.mxu0 0.0
    %954 = vmatpush1.msra.mxu0 0.0
    %955 = vmatprep.subr.mxu0 0.0
    %956 = vmatpush1.msra.mxu0 0.0
    %957 = vmatprep.subr.mxu0 0.0
    %958 = vmatpush1.msra.mxu0 0.0
    %959 = vmatprep.subr.mxu0 0.0
    %960 = vmatpush1.msra.mxu0 0.0
    %961 = vmatprep.subr.mxu0 0.0
    %962 = vmatpush1.msra.mxu0 0.0
    %963 = vmatprep.subr.mxu0 0.0
    %964 = vmatpush1.msra.mxu0 0.0
    %965 = vmatprep.subr.mxu0 0.0
    %966 = vmatpush1.msra.mxu0 0.0
    %967 = vmatprep.subr.mxu0 0.0
    %968 = vmatpush1.msra.mxu0 0.0
    %969 = vmatprep.subr.mxu0 0.0
    %970 = vmatpush1.msra.mxu0 0.0
    %971 = vmatprep.subr.mxu0 0.0
    %972 = vmatpush1.msra.mxu0 0.0
    %973 = vmatprep.subr.mxu0 0.0
    %974 = vmatpush1.msra.mxu0 0.0
    %975 = vmatprep.subr.mxu0 0.0
    %976 = vmatpush1.msra.mxu0 0.0
    %977 = vmatprep.subr.mxu0 0.0
    %978 = vmatpush1.msra.mxu0 0.0
    %979 = vmatprep.subr.mxu0 0.0
    %980 = vmatpush1.msra.mxu0 0.0
    %981 = vmatprep.subr.mxu0 0.0
    %982 = vmatpush1.msra.mxu0 0.0
    %983 = vmatprep.subr.mxu0 0.0
    %984 = vmatpush1.msra.mxu0 0.0
    %985 = vmatprep.subr.mxu0 0.0
    %986 = vmatpush1.msra.mxu0 0.0
    %987 = vmatprep.subr.mxu0 0.0
    %988 = vmatpush1.msra.mxu0 0.0
    %989 = vmatprep.subr.mxu0 0.0
    %990 = vmatpush1.msra.mxu0 0.0
    %991 = vmatprep.mubr.f32.mxu0 0.0
    %992 = vmatmul.mubr.f32.gmra.mrb[0].mxu0 %v925
    %v993 = vpop.f32.mrb[0].mxu0
    %v994 = vadd.f32 0.0, %v993
    %v995 = vpop.f32.mrb[0].mxu0
    %996 = vdwg.mxu0
    %v997 = vadd.f32 %v923, %v994
    %v998 = vtanh.pop %v997
    %1000 = vrot.lane.b32.xlu0 %v994, 96
    %v1001 = vpop.permute.xlu0 %1000
    %v1004 = vsel %vm511, %v998, 0
    %1006 = vmatprep.subr.mxu0 0.0
    %1007 = vmatpush1.msra.mxu0 %v109
    %1008 = vmatprep.subr.mxu0 0.0
    %1009 = vmatpush1.msra.mxu0 %v110
    %1010 = vmatprep.subr.mxu0 0.0
    %1011 = vmatpush1.msra.mxu0 %v111
    %1012 = vmatprep.subr.mxu0 0.0
    %1013 = vmatpush1.msra.mxu0 %v112
    %1014 = vmatprep.subr.mxu0 0.0
    %1015 = vmatpush1.msra.mxu0 0.0
    %1016 = vmatprep.subr.mxu0 0.0
    %1017 = vmatpush1.msra.mxu0 0.0
    %1018 = vmatprep.subr.mxu0 0.0
    %1019 = vmatpush1.msra.mxu0 0.0
    %1020 = vmatprep.subr.mxu0 0.0
    %1021 = vmatpush1.msra.mxu0 0.0
    %1022 = vmatprep.subr.mxu0 0.0
    %1023 = vmatpush1.msra.mxu0 0.0
    %1024 = vmatprep.subr.mxu0 0.0
    %1025 = vmatpush1.msra.mxu0 0.0
    %1026 = vmatprep.subr.mxu0 0.0
    %1027 = vmatpush1.msra.mxu0 0.0
    %1028 = vmatprep.subr.mxu0 0.0
    %1029 = vmatpush1.msra.mxu0 0.0
    %1030 = vmatprep.subr.mxu0 0.0
    %1031 = vmatpush1.msra.mxu0 0.0
    %1032 = vmatprep.subr.mxu0 0.0
    %1033 = vmatpush1.msra.mxu0 0.0
    %1034 = vmatprep.subr.mxu0 0.0
    %1035 = vmatpush1.msra.mxu0 0.0
    %1036 = vmatprep.subr.mxu0 0.0
    %1037 = vmatpush1.msra.mxu0 0.0
    %1038 = vmatprep.subr.mxu0 0.0
    %1039 = vmatpush1.msra.mxu0 0.0
    %1040 = vmatprep.subr.mxu0 0.0
    %1041 = vmatpush1.msra.mxu0 0.0
    %1042 = vmatprep.subr.mxu0 0.0
    %1043 = vmatpush1.msra.mxu0 0.0
    %1044 = vmatprep.subr.mxu0 0.0
    %1045 = vmatpush1.msra.mxu0 0.0
    %1046 = vmatprep.subr.mxu0 0.0
    %1047 = vmatpush1.msra.mxu0 0.0
    %1048 = vmatprep.subr.mxu0 0.0
    %1049 = vmatpush1.msra.mxu0 0.0
    %1050 = vmatprep.subr.mxu0 0.0
    %1051 = vmatpush1.msra.mxu0 0.0
    %1052 = vmatprep.subr.mxu0 0.0
    %1053 = vmatpush1.msra.mxu0 0.0
    %1054 = vmatprep.subr.mxu0 0.0
    %1055 = vmatpush1.msra.mxu0 0.0
    %1056 = vmatprep.subr.mxu0 0.0
    %1057 = vmatpush1.msra.mxu0 0.0
    %1058 = vmatprep.subr.mxu0 0.0
    %1059 = vmatpush1.msra.mxu0 0.0
    %1060 = vmatprep.subr.mxu0 0.0
    %1061 = vmatpush1.msra.mxu0 0.0
    %1062 = vmatprep.subr.mxu0 0.0
    %1063 = vmatpush1.msra.mxu0 0.0
    %1064 = vmatprep.subr.mxu0 0.0
    %1065 = vmatpush1.msra.mxu0 0.0
    %1066 = vmatprep.subr.mxu0 0.0
    %1067 = vmatpush1.msra.mxu0 0.0
    %1068 = vmatprep.subr.mxu0 0.0
    %1069 = vmatpush1.msra.mxu0 0.0
    %1070 = vmatprep.mubr.f32.mxu0 0.0
    %1071 = vmatmul.mubr.f32.gmra.mrb[0].mxu0 %v1004
    %v1072 = vpop.f32.mrb[0].mxu0
    %v1073 = vadd.f32 %v1001, %v1072
    %v1074 = vpop.f32.mrb[0].mxu0
    %1075 = vdwg.mxu0
    %v1076 = vadd.f32 %v1073, %v118
    %v1077 = vtanh.pop %v1076
    %1079 = vrot.lane.b32.xlu0 %v1077, 32
    %v1080 = vpop.permute.xlu0 %1079
    %v1082 = vsel %vm511, %v998, %v1080
    %v1083 = vrot.slane %v275, 4
    %v1085 = vrot.slane %v423, 3
    %v1087 = vsel %vm429, %v1083, %v1085
    %v1089 = vsel %vm431, %v1082, 0
    %1091 = vmatprep.subr.mxu0 0.0
    %1092 = vmatpush1.msra.mxu0 %v101
    %1093 = vmatprep.subr.mxu0 0.0
    %1094 = vmatpush1.msra.mxu0 %v102
    %1095 = vmatprep.subr.mxu0 0.0
    %1096 = vmatpush1.msra.mxu0 %v103
    %1097 = vmatprep.subr.mxu0 0.0
    %1098 = vmatpush1.msra.mxu0 %v104
    %1099 = vmatprep.subr.mxu0 0.0
    %1100 = vmatpush1.msra.mxu0 %v105
    %1101 = vmatprep.subr.mxu0 0.0
    %1102 = vmatpush1.msra.mxu0 %v106
    %1103 = vmatprep.subr.mxu0 0.0
    %1104 = vmatpush1.msra.mxu0 %v107
    %1105 = vmatprep.subr.mxu0 0.0
    %1106 = vmatpush1.msra.mxu0 %v108
    %1107 = vmatprep.subr.mxu0 0.0
    %1108 = vmatpush1.msra.mxu0 0.0
    %1109 = vmatprep.subr.mxu0 0.0
    %1110 = vmatpush1.msra.mxu0 0.0
    %1111 = vmatprep.subr.mxu0 0.0
    %1112 = vmatpush1.msra.mxu0 0.0
    %1113 = vmatprep.subr.mxu0 0.0
    %1114 = vmatpush1.msra.mxu0 0.0
    %1115 = vmatprep.subr.mxu0 0.0
    %1116 = vmatpush1.msra.mxu0 0.0
    %1117 = vmatprep.subr.mxu0 0.0
    %1118 = vmatpush1.msra.mxu0 0.0
    %1119 = vmatprep.subr.mxu0 0.0
    %1120 = vmatpush1.msra.mxu0 0.0
    %1121 = vmatprep.subr.mxu0 0.0
    %1122 = vmatpush1.msra.mxu0 0.0
    %1123 = vmatprep.subr.mxu0 0.0
    %1124 = vmatpush1.msra.mxu0 0.0
    %1125 = vmatprep.subr.mxu0 0.0
    %1126 = vmatpush1.msra.mxu0 0.0
    %1127 = vmatprep.subr.mxu0 0.0
    %1128 = vmatpush1.msra.mxu0 0.0
    %1129 = vmatprep.subr.mxu0 0.0
    %1130 = vmatpush1.msra.mxu0 0.0
    %1131 = vmatprep.subr.mxu0 0.0
    %1132 = vmatpush1.msra.mxu0 0.0
    %1133 = vmatprep.subr.mxu0 0.0
    %1134 = vmatpush1.msra.mxu0 0.0
    %1135 = vmatprep.subr.mxu0 0.0
    %1136 = vmatpush1.msra.mxu0 0.0
    %1137 = vmatprep.subr.mxu0 0.0
    %1138 = vmatpush1.msra.mxu0 0.0
    %1139 = vmatprep.subr.mxu0 0.0
    %1140 = vmatpush1.msra.mxu0 0.0
    %1141 = vmatprep.subr.mxu0 0.0
    %1142 = vmatpush1.msra.mxu0 0.0
    %1143 = vmatprep.subr.mxu0 0.0
    %1144 = vmatpush1.msra.mxu0 0.0
    %1145 = vmatprep.subr.mxu0 0.0
    %1146 = vmatpush1.msra.mxu0 0.0
    %1147 = vmatprep.subr.mxu0 0.0
    %1148 = vmatpush1.msra.mxu0 0.0
    %1149 = vmatprep.subr.mxu0 0.0
    %1150 = vmatpush1.msra.mxu0 0.0
    %1151 = vmatprep.subr.mxu0 0.0
    %1152 = vmatpush1.msra.mxu0 0.0
    %1153 = vmatprep.subr.mxu0 0.0
    %1154 = vmatpush1.msra.mxu0 0.0
    %1155 = vmatprep.mubr.f32.mxu0 0.0
    %1156 = vmatmul.mubr.f32.gmra.mrb[0].mxu0 %v1089
    %v1157 = vpop.f32.mrb[0].mxu0
    %v1158 = vadd.f32 0.0, %v1157
    %v1159 = vpop.f32.mrb[0].mxu0
    %1160 = vdwg.mxu0
    %v1161 = vadd.f32 %v1087, %v1158
    %v1162 = vtanh.pop %v1161
    %1164 = vrot.lane.b32.xlu0 %v1158, 96
    %v1165 = vpop.permute.xlu0 %1164
    %v1168 = vsel %vm511, %v1162, 0
    %1170 = vmatprep.subr.mxu0 0.0
    %1171 = vmatpush1.msra.mxu0 %v109
    %1172 = vmatprep.subr.mxu0 0.0
    %1173 = vmatpush1.msra.mxu0 %v110
    %1174 = vmatprep.subr.mxu0 0.0
    %1175 = vmatpush1.msra.mxu0 %v111
    %1176 = vmatprep.subr.mxu0 0.0
    %1177 = vmatpush1.msra.mxu0 %v112
    %1178 = vmatprep.subr.mxu0 0.0
    %1179 = vmatpush1.msra.mxu0 0.0
    %1180 = vmatprep.subr.mxu0 0.0
    %1181 = vmatpush1.msra.mxu0 0.0
    %1182 = vmatprep.subr.mxu0 0.0
    %1183 = vmatpush1.msra.mxu0 0.0
    %1184 = vmatprep.subr.mxu0 0.0
    %1185 = vmatpush1.msra.mxu0 0.0
    %1186 = vmatprep.subr.mxu0 0.0
    %1187 = vmatpush1.msra.mxu0 0.0
    %1188 = vmatprep.subr.mxu0 0.0
    %1189 = vmatpush1.msra.mxu0 0.0
    %1190 = vmatprep.subr.mxu0 0.0
    %1191 = vmatpush1.msra.mxu0 0.0
    %1192 = vmatprep.subr.mxu0 0.0
    %1193 = vmatpush1.msra.mxu0 0.0
    %1194 = vmatprep.subr.mxu0 0.0
    %1195 = vmatpush1.msra.mxu0 0.0
    %1196 = vmatprep.subr.mxu0 0.0
    %1197 = vmatpush1.msra.mxu0 0.0
    %1198 = vmatprep.subr.mxu0 0.0
    %1199 = vmatpush1.msra.mxu0 0.0
    %1200 = vmatprep.subr.mxu0 0.0
    %1201 = vmatpush1.msra.mxu0 0.0
    %1202 = vmatprep.subr.mxu0 0.0
    %1203 = vmatpush1.msra.mxu0 0.0
    %1204 = vmatprep.subr.mxu0 0.0
    %1205 = vmatpush1.msra.mxu0 0.0
    %1206 = vmatprep.subr.mxu0 0.0
    %1207 = vmatpush1.msra.mxu0 0.0
    %1208 = vmatprep.subr.mxu0 0.0
    %1209 = vmatpush1.msra.mxu0 0.0
    %1210 = vmatprep.subr.mxu0 0.0
    %1211 = vmatpush1.msra.mxu0 0.0
    %1212 = vmatprep.subr.mxu0 0.0
    %1213 = vmatpush1.msra.mxu0 0.0
    %1214 = vmatprep.subr.mxu0 0.0
    %1215 = vmatpush1.msra.mxu0 0.0
    %1216 = vmatprep.subr.mxu0 0.0
    %1217 = vmatpush1.msra.mxu0 0.0
    %1218 = vmatprep.subr.mxu0 0.0
    %1219 = vmatpush1.msra.mxu0 0.0
    %1220 = vmatprep.subr.mxu0 0.0
    %1221 = vmatpush1.msra.mxu0 0.0
    %1222 = vmatprep.subr.mxu0 0.0
    %1223 = vmatpush1.msra.mxu0 0.0
    %1224 = vmatprep.subr.mxu0 0.0
    %1225 = vmatpush1.msra.mxu0 0.0
    %1226 = vmatprep.subr.mxu0 0.0
    %1227 = vmatpush1.msra.mxu0 0.0
    %1228 = vmatprep.subr.mxu0 0.0
    %1229 = vmatpush1.msra.mxu0 0.0
    %1230 = vmatprep.subr.mxu0 0.0
    %1231 = vmatpush1.msra.mxu0 0.0
    %1232 = vmatprep.subr.mxu0 0.0
    %1233 = vmatpush1.msra.mxu0 0.0
    %1234 = vmatprep.mubr.f32.mxu0 0.0
    %1235 = vmatmul.mubr.f32.gmra.mrb[0].mxu0 %v1168
    %v1236 = vpop.f32.mrb[0].mxu0
    %v1237 = vadd.f32 %v1165, %v1236
    %v1238 = vpop.f32.mrb[0].mxu0
    %1239 = vdwg.mxu0
    %v1240 = vadd.f32 %v1237, %v118
    %v1241 = vtanh.pop %v1240
    %1243 = vrot.lane.b32.xlu0 %v1241, 32
    %v1244 = vpop.permute.xlu0 %1243
    %v1246 = vsel %vm511, %v1162, %v1244
    %v1247 = vrot.slane %v275, 5
    %v1249 = vrot.slane %v423, 4
    %v1251 = vsel %vm429, %v1247, %v1249
    %v1253 = vsel %vm431, %v1246, 0
    %1255 = vmatprep.subr.mxu0 0.0
    %1256 = vmatpush1.msra.mxu0 %v101
    %1257 = vmatprep.subr.mxu0 0.0
    %1258 = vmatpush1.msra.mxu0 %v102
    %1259 = vmatprep.subr.mxu0 0.0
    %1260 = vmatpush1.msra.mxu0 %v103
    %1261 = vmatprep.subr.mxu0 0.0
    %1262 = vmatpush1.msra.mxu0 %v104
    %1263 = vmatprep.subr.mxu0 0.0
    %1264 = vmatpush1.msra.mxu0 %v105
    %1265 = vmatprep.subr.mxu0 0.0
    %1266 = vmatpush1.msra.mxu0 %v106
    %1267 = vmatprep.subr.mxu0 0.0
    %1268 = vmatpush1.msra.mxu0 %v107
    %1269 = vmatprep.subr.mxu0 0.0
    %1270 = vmatpush1.msra.mxu0 %v108
    %1271 = vmatprep.subr.mxu0 0.0
    %1272 = vmatpush1.msra.mxu0 0.0
    %1273 = vmatprep.subr.mxu0 0.0
    %1274 = vmatpush1.msra.mxu0 0.0
    %1275 = vmatprep.subr.mxu0 0.0
    %1276 = vmatpush1.msra.mxu0 0.0
    %1277 = vmatprep.subr.mxu0 0.0
    %1278 = vmatpush1.msra.mxu0 0.0
    %1279 = vmatprep.subr.mxu0 0.0
    %1280 = vmatpush1.msra.mxu0 0.0
    %1281 = vmatprep.subr.mxu0 0.0
    %1282 = vmatpush1.msra.mxu0 0.0
    %1283 = vmatprep.subr.mxu0 0.0
    %1284 = vmatpush1.msra.mxu0 0.0
    %1285 = vmatprep.subr.mxu0 0.0
    %1286 = vmatpush1.msra.mxu0 0.0
    %1287 = vmatprep.subr.mxu0 0.0
    %1288 = vmatpush1.msra.mxu0 0.0
    %1289 = vmatprep.subr.mxu0 0.0
    %1290 = vmatpush1.msra.mxu0 0.0
    %1291 = vmatprep.subr.mxu0 0.0
    %1292 = vmatpush1.msra.mxu0 0.0
    %1293 = vmatprep.subr.mxu0 0.0
    %1294 = vmatpush1.msra.mxu0 0.0
    %1295 = vmatprep.subr.mxu0 0.0
    %1296 = vmatpush1.msra.mxu0 0.0
    %1297 = vmatprep.subr.mxu0 0.0
    %1298 = vmatpush1.msra.mxu0 0.0
    %1299 = vmatprep.subr.mxu0 0.0
    %1300 = vmatpush1.msra.mxu0 0.0
    %1301 = vmatprep.subr.mxu0 0.0
    %1302 = vmatpush1.msra.mxu0 0.0
    %1303 = vmatprep.subr.mxu0 0.0
    %1304 = vmatpush1.msra.mxu0 0.0
    %1305 = vmatprep.subr.mxu0 0.0
    %1306 = vmatpush1.msra.mxu0 0.0
    %1307 = vmatprep.subr.mxu0 0.0
    %1308 = vmatpush1.msra.mxu0 0.0
    %1309 = vmatprep.subr.mxu0 0.0
    %1310 = vmatpush1.msra.mxu0 0.0
    %1311 = vmatprep.subr.mxu0 0.0
    %1312 = vmatpush1.msra.mxu0 0.0
    %1313 = vmatprep.subr.mxu0 0.0
    %1314 = vmatpush1.msra.mxu0 0.0
    %1315 = vmatprep.subr.mxu0 0.0
    %1316 = vmatpush1.msra.mxu0 0.0
    %1317 = vmatprep.subr.mxu0 0.0
    %1318 = vmatpush1.msra.mxu0 0.0
    %1319 = vmatprep.mubr.f32.mxu0 0.0
    %1320 = vmatmul.mubr.f32.gmra.mrb[0].mxu0 %v1253
    %v1321 = vpop.f32.mrb[0].mxu0
    %v1322 = vadd.f32 0.0, %v1321
    %v1323 = vpop.f32.mrb[0].mxu0
    %1324 = vdwg.mxu0
    %v1325 = vadd.f32 %v1251, %v1322
    %v1326 = vtanh.pop %v1325
    %1328 = vrot.lane.b32.xlu0 %v1322, 96
    %v1329 = vpop.permute.xlu0 %1328
    %v1332 = vsel %vm511, %v1326, 0
    %1334 = vmatprep.subr.mxu0 0.0
    %1335 = vmatpush1.msra.mxu0 %v109
    %1336 = vmatprep.subr.mxu0 0.0
    %1337 = vmatpush1.msra.mxu0 %v110
    %1338 = vmatprep.subr.mxu0 0.0
    %1339 = vmatpush1.msra.mxu0 %v111
    %1340 = vmatprep.subr.mxu0 0.0
    %1341 = vmatpush1.msra.mxu0 %v112
    %1342 = vmatprep.subr.mxu0 0.0
    %1343 = vmatpush1.msra.mxu0 0.0
    %1344 = vmatprep.subr.mxu0 0.0
    %1345 = vmatpush1.msra.mxu0 0.0
    %1346 = vmatprep.subr.mxu0 0.0
    %1347 = vmatpush1.msra.mxu0 0.0
    %1348 = vmatprep.subr.mxu0 0.0
    %1349 = vmatpush1.msra.mxu0 0.0
    %1350 = vmatprep.subr.mxu0 0.0
    %1351 = vmatpush1.msra.mxu0 0.0
    %1352 = vmatprep.subr.mxu0 0.0
    %1353 = vmatpush1.msra.mxu0 0.0
    %1354 = vmatprep.subr.mxu0 0.0
    %1355 = vmatpush1.msra.mxu0 0.0
    %1356 = vmatprep.subr.mxu0 0.0
    %1357 = vmatpush1.msra.mxu0 0.0
    %1358 = vmatprep.subr.mxu0 0.0
    %1359 = vmatpush1.msra.mxu0 0.0
    %1360 = vmatprep.subr.mxu0 0.0
    %1361 = vmatpush1.msra.mxu0 0.0
    %1362 = vmatprep.subr.mxu0 0.0
    %1363 = vmatpush1.msra.mxu0 0.0
    %1364 = vmatprep.subr.mxu0 0.0
    %1365 = vmatpush1.msra.mxu0 0.0
    %1366 = vmatprep.subr.mxu0 0.0
    %1367 = vmatpush1.msra.mxu0 0.0
    %1368 = vmatprep.subr.mxu0 0.0
    %1369 = vmatpush1.msra.mxu0 0.0
    %1370 = vmatprep.subr.mxu0 0.0
    %1371 = vmatpush1.msra.mxu0 0.0
    %1372 = vmatprep.subr.mxu0 0.0
    %1373 = vmatpush1.msra.mxu0 0.0
    %1374 = vmatprep.subr.mxu0 0.0
    %1375 = vmatpush1.msra.mxu0 0.0
    %1376 = vmatprep.subr.mxu0 0.0
    %1377 = vmatpush1.msra.mxu0 0.0
    %1378 = vmatprep.subr.mxu0 0.0
    %1379 = vmatpush1.msra.mxu0 0.0
    %1380 = vmatprep.subr.mxu0 0.0
    %1381 = vmatpush1.msra.mxu0 0.0
    %1382 = vmatprep.subr.mxu0 0.0
    %1383 = vmatpush1.msra.mxu0 0.0
    %1384 = vmatprep.subr.mxu0 0.0
    %1385 = vmatpush1.msra.mxu0 0.0
    %1386 = vmatprep.subr.mxu0 0.0
    %1387 = vmatpush1.msra.mxu0 0.0
    %1388 = vmatprep.subr.mxu0 0.0
    %1389 = vmatpush1.msra.mxu0 0.0
    %1390 = vmatprep.subr.mxu0 0.0
    %1391 = vmatpush1.msra.mxu0 0.0
    %1392 = vmatprep.subr.mxu0 0.0
    %1393 = vmatpush1.msra.mxu0 0.0
    %1394 = vmatprep.subr.mxu0 0.0
    %1395 = vmatpush1.msra.mxu0 0.0
    %1396 = vmatprep.subr.mxu0 0.0
    %1397 = vmatpush1.msra.mxu0 0.0
    %1398 = vmatprep.mubr.f32.mxu0 0.0
    %1399 = vmatmul.mubr.f32.gmra.mrb[0].mxu0 %v1332
    %v1400 = vpop.f32.mrb[0].mxu0
    %v1401 = vadd.f32 %v1329, %v1400
    %v1402 = vpop.f32.mrb[0].mxu0
    %1403 = vdwg.mxu0
    %v1404 = vadd.f32 %v1401, %v118
    %v1405 = vtanh.pop %v1404
    %1407 = vrot.lane.b32.xlu0 %v1405, 32
    %v1408 = vpop.permute.xlu0 %1407
    %v1410 = vsel %vm511, %v1326, %v1408
    %v1411 = vrot.slane %v275, 6
    %v1413 = vrot.slane %v423, 5
    %v1415 = vsel %vm429, %v1411, %v1413
    %v1417 = vsel %vm431, %v1410, 0
    %1419 = vmatprep.subr.mxu0 0.0
    %1420 = vmatpush1.msra.mxu0 %v101
    %1421 = vmatprep.subr.mxu0 0.0
    %1422 = vmatpush1.msra.mxu0 %v102
    %1423 = vmatprep.subr.mxu0 0.0
    %1424 = vmatpush1.msra.mxu0 %v103
    %1425 = vmatprep.subr.mxu0 0.0
    %1426 = vmatpush1.msra.mxu0 %v104
    %1427 = vmatprep.subr.mxu0 0.0
    %1428 = vmatpush1.msra.mxu0 %v105
    %1429 = vmatprep.subr.mxu0 0.0
    %1430 = vmatpush1.msra.mxu0 %v106
    %1431 = vmatprep.subr.mxu0 0.0
    %1432 = vmatpush1.msra.mxu0 %v107
    %1433 = vmatprep.subr.mxu0 0.0
    %1434 = vmatpush1.msra.mxu0 %v108
    %1435 = vmatprep.subr.mxu0 0.0
    %1436 = vmatpush1.msra.mxu0 0.0
    %1437 = vmatprep.subr.mxu0 0.0
    %1438 = vmatpush1.msra.mxu0 0.0
    %1439 = vmatprep.subr.mxu0 0.0
    %1440 = vmatpush1.msra.mxu0 0.0
    %1441 = vmatprep.subr.mxu0 0.0
    %1442 = vmatpush1.msra.mxu0 0.0
    %1443 = vmatprep.subr.mxu0 0.0
    %1444 = vmatpush1.msra.mxu0 0.0
    %1445 = vmatprep.subr.mxu0 0.0
    %1446 = vmatpush1.msra.mxu0 0.0
    %1447 = vmatprep.subr.mxu0 0.0
    %1448 = vmatpush1.msra.mxu0 0.0
    %1449 = vmatprep.subr.mxu0 0.0
    %1450 = vmatpush1.msra.mxu0 0.0
    %1451 = vmatprep.subr.mxu0 0.0
    %1452 = vmatpush1.msra.mxu0 0.0
    %1453 = vmatprep.subr.mxu0 0.0
    %1454 = vmatpush1.msra.mxu0 0.0
    %1455 = vmatprep.subr.mxu0 0.0
    %1456 = vmatpush1.msra.mxu0 0.0
    %1457 = vmatprep.subr.mxu0 0.0
    %1458 = vmatpush1.msra.mxu0 0.0
    %1459 = vmatprep.subr.mxu0 0.0
    %1460 = vmatpush1.msra.mxu0 0.0
    %1461 = vmatprep.subr.mxu0 0.0
    %1462 = vmatpush1.msra.mxu0 0.0
    %1463 = vmatprep.subr.mxu0 0.0
    %1464 = vmatpush1.msra.mxu0 0.0
    %1465 = vmatprep.subr.mxu0 0.0
    %1466 = vmatpush1.msra.mxu0 0.0
    %1467 = vmatprep.subr.mxu0 0.0
    %1468 = vmatpush1.msra.mxu0 0.0
    %1469 = vmatprep.subr.mxu0 0.0
    %1470 = vmatpush1.msra.mxu0 0.0
    %1471 = vmatprep.subr.mxu0 0.0
    %1472 = vmatpush1.msra.mxu0 0.0
    %1473 = vmatprep.subr.mxu0 0.0
    %1474 = vmatpush1.msra.mxu0 0.0
    %1475 = vmatprep.subr.mxu0 0.0
    %1476 = vmatpush1.msra.mxu0 0.0
    %1477 = vmatprep.subr.mxu0 0.0
    %1478 = vmatpush1.msra.mxu0 0.0
    %1479 = vmatprep.subr.mxu0 0.0
    %1480 = vmatpush1.msra.mxu0 0.0
    %1481 = vmatprep.subr.mxu0 0.0
    %1482 = vmatpush1.msra.mxu0 0.0
    %1483 = vmatprep.mubr.f32.mxu0 0.0
    %1484 = vmatmul.mubr.f32.gmra.mrb[0].mxu0 %v1417
    %v1485 = vpop.f32.mrb[0].mxu0
    %v1486 = vadd.f32 0.0, %v1485
    %v1487 = vpop.f32.mrb[0].mxu0
    %1488 = vdwg.mxu0
    %v1489 = vadd.f32 %v1415, %v1486
    %v1490 = vtanh.pop %v1489
    %1492 = vrot.lane.b32.xlu0 %v1486, 96
    %v1493 = vpop.permute.xlu0 %1492
    %v1496 = vsel %vm511, %v1490, 0
    %1498 = vmatprep.subr.mxu0 0.0
    %1499 = vmatpush1.msra.mxu0 %v109
    %1500 = vmatprep.subr.mxu0 0.0
    %1501 = vmatpush1.msra.mxu0 %v110
    %1502 = vmatprep.subr.mxu0 0.0
    %1503 = vmatpush1.msra.mxu0 %v111
    %1504 = vmatprep.subr.mxu0 0.0
    %1505 = vmatpush1.msra.mxu0 %v112
    %1506 = vmatprep.subr.mxu0 0.0
    %1507 = vmatpush1.msra.mxu0 0.0
    %1508 = vmatprep.subr.mxu0 0.0
    %1509 = vmatpush1.msra.mxu0 0.0
    %1510 = vmatprep.subr.mxu0 0.0
    %1511 = vmatpush1.msra.mxu0 0.0
    %1512 = vmatprep.subr.mxu0 0.0
    %1513 = vmatpush1.msra.mxu0 0.0
    %1514 = vmatprep.subr.mxu0 0.0
    %1515 = vmatpush1.msra.mxu0 0.0
    %1516 = vmatprep.subr.mxu0 0.0
    %1517 = vmatpush1.msra.mxu0 0.0
    %1518 = vmatprep.subr.mxu0 0.0
    %1519 = vmatpush1.msra.mxu0 0.0
    %1520 = vmatprep.subr.mxu0 0.0
    %1521 = vmatpush1.msra.mxu0 0.0
    %1522 = vmatprep.subr.mxu0 0.0
    %1523 = vmatpush1.msra.mxu0 0.0
    %1524 = vmatprep.subr.mxu0 0.0
    %1525 = vmatpush1.msra.mxu0 0.0
    %1526 = vmatprep.subr.mxu0 0.0
    %1527 = vmatpush1.msra.mxu0 0.0
    %1528 = vmatprep.subr.mxu0 0.0
    %1529 = vmatpush1.msra.mxu0 0.0
    %1530 = vmatprep.subr.mxu0 0.0
    %1531 = vmatpush1.msra.mxu0 0.0
    %1532 = vmatprep.subr.mxu0 0.0
    %1533 = vmatpush1.msra.mxu0 0.0
    %1534 = vmatprep.subr.mxu0 0.0
    %1535 = vmatpush1.msra.mxu0 0.0
    %1536 = vmatprep.subr.mxu0 0.0
    %1537 = vmatpush1.msra.mxu0 0.0
    %1538 = vmatprep.subr.mxu0 0.0
    %1539 = vmatpush1.msra.mxu0 0.0
    %1540 = vmatprep.subr.mxu0 0.0
    %1541 = vmatpush1.msra.mxu0 0.0
    %1542 = vmatprep.subr.mxu0 0.0
    %1543 = vmatpush1.msra.mxu0 0.0
    %1544 = vmatprep.subr.mxu0 0.0
    %1545 = vmatpush1.msra.mxu0 0.0
    %1546 = vmatprep.subr.mxu0 0.0
    %1547 = vmatpush1.msra.mxu0 0.0
    %1548 = vmatprep.subr.mxu0 0.0
    %1549 = vmatpush1.msra.mxu0 0.0
    %1550 = vmatprep.subr.mxu0 0.0
    %1551 = vmatpush1.msra.mxu0 0.0
    %1552 = vmatprep.subr.mxu0 0.0
    %1553 = vmatpush1.msra.mxu0 0.0
    %1554 = vmatprep.subr.mxu0 0.0
    %1555 = vmatpush1.msra.mxu0 0.0
    %1556 = vmatprep.subr.mxu0 0.0
    %1557 = vmatpush1.msra.mxu0 0.0
    %1558 = vmatprep.subr.mxu0 0.0
    %1559 = vmatpush1.msra.mxu0 0.0
    %1560 = vmatprep.subr.mxu0 0.0
    %1561 = vmatpush1.msra.mxu0 0.0
    %1562 = vmatprep.mubr.f32.mxu0 0.0
    %1563 = vmatmul.mubr.f32.gmra.mrb[0].mxu0 %v1496
    %v1564 = vpop.f32.mrb[0].mxu0
    %v1565 = vadd.f32 %v1493, %v1564
    %v1566 = vpop.f32.mrb[0].mxu0
    %1567 = vdwg.mxu0
    %v1568 = vadd.f32 %v1565, %v118
    %v1569 = vtanh.pop %v1568
    %1571 = vrot.lane.b32.xlu0 %v1569, 32
    %v1572 = vpop.permute.xlu0 %1571
    %v1574 = vsel %vm511, %v1490, %v1572
    %v1575 = vrot.slane %v275, 7
    %v1577 = vrot.slane %v423, 6
    %v1579 = vsel %vm429, %v1575, %v1577
    %v1581 = vsel %vm431, %v1574, 0
    %1583 = vmatprep.subr.mxu0 0.0
    %1584 = vmatpush1.msra.mxu0 %v101
    %1585 = vmatprep.subr.mxu0 0.0
    %1586 = vmatpush1.msra.mxu0 %v102
    %1587 = vmatprep.subr.mxu0 0.0
    %1588 = vmatpush1.msra.mxu0 %v103
    %1589 = vmatprep.subr.mxu0 0.0
    %1590 = vmatpush1.msra.mxu0 %v104
    %1591 = vmatprep.subr.mxu0 0.0
    %1592 = vmatpush1.msra.mxu0 %v105
    %1593 = vmatprep.subr.mxu0 0.0
    %1594 = vmatpush1.msra.mxu0 %v106
    %1595 = vmatprep.subr.mxu0 0.0
    %1596 = vmatpush1.msra.mxu0 %v107
    %1597 = vmatprep.subr.mxu0 0.0
    %1598 = vmatpush1.msra.mxu0 %v108
    %1599 = vmatprep.subr.mxu0 0.0
    %1600 = vmatpush1.msra.mxu0 0.0
    %1601 = vmatprep.subr.mxu0 0.0
    %1602 = vmatpush1.msra.mxu0 0.0
    %1603 = vmatprep.subr.mxu0 0.0
    %1604 = vmatpush1.msra.mxu0 0.0
    %1605 = vmatprep.subr.mxu0 0.0
    %1606 = vmatpush1.msra.mxu0 0.0
    %1607 = vmatprep.subr.mxu0 0.0
    %1608 = vmatpush1.msra.mxu0 0.0
    %1609 = vmatprep.subr.mxu0 0.0
    %1610 = vmatpush1.msra.mxu0 0.0
    %1611 = vmatprep.subr.mxu0 0.0
    %1612 = vmatpush1.msra.mxu0 0.0
    %1613 = vmatprep.subr.mxu0 0.0
    %1614 = vmatpush1.msra.mxu0 0.0
    %1615 = vmatprep.subr.mxu0 0.0
    %1616 = vmatpush1.msra.mxu0 0.0
    %1617 = vmatprep.subr.mxu0 0.0
    %1618 = vmatpush1.msra.mxu0 0.0
    %1619 = vmatprep.subr.mxu0 0.0
    %1620 = vmatpush1.msra.mxu0 0.0
    %1621 = vmatprep.subr.mxu0 0.0
    %1622 = vmatpush1.msra.mxu0 0.0
    %1623 = vmatprep.subr.mxu0 0.0
    %1624 = vmatpush1.msra.mxu0 0.0
    %1625 = vmatprep.subr.mxu0 0.0
    %1626 = vmatpush1.msra.mxu0 0.0
    %1627 = vmatprep.subr.mxu0 0.0
    %1628 = vmatpush1.msra.mxu0 0.0
    %1629 = vmatprep.subr.mxu0 0.0
    %1630 = vmatpush1.msra.mxu0 0.0
    %1631 = vmatprep.subr.mxu0 0.0
    %1632 = vmatpush1.msra.mxu0 0.0
    %1633 = vmatprep.subr.mxu0 0.0
    %1634 = vmatpush1.msra.mxu0 0.0
    %1635 = vmatprep.subr.mxu0 0.0
    %1636 = vmatpush1.msra.mxu0 0.0
    %1637 = vmatprep.subr.mxu0 0.0
    %1638 = vmatpush1.msra.mxu0 0.0
    %1639 = vmatprep.subr.mxu0 0.0
    %1640 = vmatpush1.msra.mxu0 0.0
    %1641 = vmatprep.subr.mxu0 0.0
    %1642 = vmatpush1.msra.mxu0 0.0
    %1643 = vmatprep.subr.mxu0 0.0
    %1644 = vmatpush1.msra.mxu0 0.0
    %1645 = vmatprep.subr.mxu0 0.0
    %1646 = vmatpush1.msra.mxu0 0.0
    %1647 = vmatprep.mubr.f32.mxu0 0.0
    %1648 = vmatmul.mubr.f32.gmra.mrb[0].mxu0 %v1581
    %v1649 = vpop.f32.mrb[0].mxu0
    %v1650 = vadd.f32 0.0, %v1649
    %v1651 = vpop.f32.mrb[0].mxu0
    %1652 = vdwg.mxu0
    %v1653 = vadd.f32 %v1579, %v1650
    %v1654 = vtanh.pop %v1653
    %1656 = vrot.lane.b32.xlu0 %v1650, 96
    %v1657 = vpop.permute.xlu0 %1656
    %v1660 = vsel %vm511, %v1654, 0
    %1662 = vmatprep.subr.mxu0 0.0
    %1663 = vmatpush1.msra.mxu0 %v109
    %1664 = vmatprep.subr.mxu0 0.0
    %1665 = vmatpush1.msra.mxu0 %v110
    %1666 = vmatprep.subr.mxu0 0.0
    %1667 = vmatpush1.msra.mxu0 %v111
    %1668 = vmatprep.subr.mxu0 0.0
    %1669 = vmatpush1.msra.mxu0 %v112
    %1670 = vmatprep.subr.mxu0 0.0
    %1671 = vmatpush1.msra.mxu0 0.0
    %1672 = vmatprep.subr.mxu0 0.0
    %1673 = vmatpush1.msra.mxu0 0.0
    %1674 = vmatprep.subr.mxu0 0.0
    %1675 = vmatpush1.msra.mxu0 0.0
    %1676 = vmatprep.subr.mxu0 0.0
    %1677 = vmatpush1.msra.mxu0 0.0
    %1678 = vmatprep.subr.mxu0 0.0
    %1679 = vmatpush1.msra.mxu0 0.0
    %1680 = vmatprep.subr.mxu0 0.0
    %1681 = vmatpush1.msra.mxu0 0.0
    %1682 = vmatprep.subr.mxu0 0.0
    %1683 = vmatpush1.msra.mxu0 0.0
    %1684 = vmatprep.subr.mxu0 0.0
    %1685 = vmatpush1.msra.mxu0 0.0
    %1686 = vmatprep.subr.mxu0 0.0
    %1687 = vmatpush1.msra.mxu0 0.0
    %1688 = vmatprep.subr.mxu0 0.0
    %1689 = vmatpush1.msra.mxu0 0.0
    %1690 = vmatprep.subr.mxu0 0.0
    %1691 = vmatpush1.msra.mxu0 0.0
    %1692 = vmatprep.subr.mxu0 0.0
    %1693 = vmatpush1.msra.mxu0 0.0
    %1694 = vmatprep.subr.mxu0 0.0
    %1695 = vmatpush1.msra.mxu0 0.0
    %1696 = vmatprep.subr.mxu0 0.0
    %1697 = vmatpush1.msra.mxu0 0.0
    %1698 = vmatprep.subr.mxu0 0.0
    %1699 = vmatpush1.msra.mxu0 0.0
    %1700 = vmatprep.subr.mxu0 0.0
    %1701 = vmatpush1.msra.mxu0 0.0
    %1702 = vmatprep.subr.mxu0 0.0
    %1703 = vmatpush1.msra.mxu0 0.0
    %1704 = vmatprep.subr.mxu0 0.0
    %1705 = vmatpush1.msra.mxu0 0.0
    %1706 = vmatprep.subr.mxu0 0.0
    %1707 = vmatpush1.msra.mxu0 0.0
    %1708 = vmatprep.subr.mxu0 0.0
    %1709 = vmatpush1.msra.mxu0 0.0
    %1710 = vmatprep.subr.mxu0 0.0
    %1711 = vmatpush1.msra.mxu0 0.0
    %1712 = vmatprep.subr.mxu0 0.0
    %1713 = vmatpush1.msra.mxu0 0.0
    %1714 = vmatprep.subr.mxu0 0.0
    %1715 = vmatpush1.msra.mxu0 0.0
    %1716 = vmatprep.subr.mxu0 0.0
    %1717 = vmatpush1.msra.mxu0 0.0
    %1718 = vmatprep.subr.mxu0 0.0
    %1719 = vmatpush1.msra.mxu0 0.0
    %1720 = vmatprep.subr.mxu0 0.0
    %1721 = vmatpush1.msra.mxu0 0.0
    %1722 = vmatprep.subr.mxu0 0.0
    %1723 = vmatpush1.msra.mxu0 0.0
    %1724 = vmatprep.subr.mxu0 0.0
    %1725 = vmatpush1.msra.mxu0 0.0
    %1726 = vmatprep.mubr.f32.mxu0 0.0
    %1727 = vmatmul.mubr.f32.gmra.mrb[0].mxu0 %v1660
    %v1728 = vpop.f32.mrb[0].mxu0
    %v1729 = vadd.f32 %v1657, %v1728
    %v1730 = vpop.f32.mrb[0].mxu0
    %1731 = vdwg.mxu0
    %v1732 = vadd.f32 %v1729, %v118
    %v1733 = vtanh.pop %v1732
    %v1734 = vmax.f32 %v1733, 0.0
    %v1735 = vld [vmem:[%s6] sm:$0xff]
    %v1736 = vld [vmem:[%s6 + $0x8] sm:$0xff]
    %v1737 = vld [vmem:[%s6 + $0x10] sm:$0xff]
    %v1738 = vld [vmem:[%s6 + $0x18] sm:$0xff]
    %v1739 = vld [vmem:[%s7] sm:$0x1]
    %v1741 = vlaneseq
    %v1742 = vshrl.u32 %v1741, 7
    %v1743 = vsub.s32 0, %v1742
    %v1744 = vrot.slane %v1739, %v1743
    %v1747 = vsel %vm511, %v1734, 0
    %1749 = vmatprep.subr.mxu0 0.0
    %1750 = vmatpush1.msra.mxu0 %v1735
    %1751 = vmatprep.subr.mxu0 0.0
    %1752 = vmatpush1.msra.mxu0 %v1736
    %1753 = vmatprep.subr.mxu0 0.0
    %1754 = vmatpush1.msra.mxu0 %v1737
    %1755 = vmatprep.subr.mxu0 0.0
    %1756 = vmatpush1.msra.mxu0 %v1738
    %1757 = vmatprep.subr.mxu0 0.0
    %1758 = vmatpush1.msra.mxu0 0.0
    %1759 = vmatprep.subr.mxu0 0.0
    %1760 = vmatpush1.msra.mxu0 0.0
    %1761 = vmatprep.subr.mxu0 0.0
    %1762 = vmatpush1.msra.mxu0 0.0
    %1763 = vmatprep.subr.mxu0 0.0
    %1764 = vmatpush1.msra.mxu0 0.0
    %1765 = vmatprep.subr.mxu0 0.0
    %1766 = vmatpush1.msra.mxu0 0.0
    %1767 = vmatprep.subr.mxu0 0.0
    %1768 = vmatpush1.msra.mxu0 0.0
    %1769 = vmatprep.subr.mxu0 0.0
    %1770 = vmatpush1.msra.mxu0 0.0
    %1771 = vmatprep.subr.mxu0 0.0
    %1772 = vmatpush1.msra.mxu0 0.0
    %1773 = vmatprep.subr.mxu0 0.0
    %1774 = vmatpush1.msra.mxu0 0.0
    %1775 = vmatprep.subr.mxu0 0.0
    %1776 = vmatpush1.msra.mxu0 0.0
    %1777 = vmatprep.subr.mxu0 0.0
    %1778 = vmatpush1.msra.mxu0 0.0
    %1779 = vmatprep.subr.mxu0 0.0
    %1780 = vmatpush1.msra.mxu0 0.0
    %1781 = vmatprep.subr.mxu0 0.0
    %1782 = vmatpush1.msra.mxu0 0.0
    %1783 = vmatprep.subr.mxu0 0.0
    %1784 = vmatpush1.msra.mxu0 0.0
    %1785 = vmatprep.subr.mxu0 0.0
    %1786 = vmatpush1.msra.mxu0 0.0
    %1787 = vmatprep.subr.mxu0 0.0
    %1788 = vmatpush1.msra.mxu0 0.0
    %1789 = vmatprep.subr.mxu0 0.0
    %1790 = vmatpush1.msra.mxu0 0.0
    %1791 = vmatprep.subr.mxu0 0.0
    %1792 = vmatpush1.msra.mxu0 0.0
    %1793 = vmatprep.subr.mxu0 0.0
    %1794 = vmatpush1.msra.mxu0 0.0
    %1795 = vmatprep.subr.mxu0 0.0
    %1796 = vmatpush1.msra.mxu0 0.0
    %1797 = vmatprep.subr.mxu0 0.0
    %1798 = vmatpush1.msra.mxu0 0.0
    %1799 = vmatprep.subr.mxu0 0.0
    %1800 = vmatpush1.msra.mxu0 0.0
    %1801 = vmatprep.subr.mxu0 0.0
    %1802 = vmatpush1.msra.mxu0 0.0
    %1803 = vmatprep.subr.mxu0 0.0
    %1804 = vmatpush1.msra.mxu0 0.0
    %1805 = vmatprep.subr.mxu0 0.0
    %1806 = vmatpush1.msra.mxu0 0.0
    %1807 = vmatprep.subr.mxu0 0.0
    %1808 = vmatpush1.msra.mxu0 0.0
    %1809 = vmatprep.subr.mxu0 0.0
    %1810 = vmatpush1.msra.mxu0 0.0
    %1811 = vmatprep.subr.mxu0 0.0
    %1812 = vmatpush1.msra.mxu0 0.0
    %1813 = vmatprep.mubr.f32.mxu0 0.0
    %1814 = vmatmul.mubr.f32.gmra.mrb[0].mxu0 %v1747
    %v1815 = vpop.f32.mrb[0].mxu0
    %v1816 = vadd.f32 %v1744, %v1815
    %v1817 = vpop.f32.mrb[0].mxu0
    %1818 = vdwg.mxu0
    %v1819 = vmax.f32 %v1816, 0.0
    %v1820 = vld [vmem:[%s8] sm:$0xff]
    %v1821 = vld [vmem:[%s8 + $0x8] sm:$0xff]
    %v1822 = vld [vmem:[%s8 + $0x10] sm:$0xff]
    %v1823 = vld [vmem:[%s8 + $0x18] sm:$0xff]
    %v1824 = vld [vmem:[%s8 + $0x20] sm:$0xff]
    %v1825 = vld [vmem:[%s8 + $0x28] sm:$0xff]
    %v1826 = vld [vmem:[%s9] sm:$0x1]
    %v1828 = vlaneseq
    %v1829 = vshrl.u32 %v1828, 7
    %v1830 = vsub.s32 0, %v1829
    %v1831 = vrot.slane %v1826, %v1830
    %vm1833 = vcmask 392192
    %v1835 = vsel %vm1833, %v1819, 0
    %1837 = vmatprep.subr.mxu0 0.0
    %1838 = vmatpush1.msra.mxu0 %v1820
    %1839 = vmatprep.subr.mxu0 0.0
    %1840 = vmatpush1.msra.mxu0 %v1821
    %1841 = vmatprep.subr.mxu0 0.0
    %1842 = vmatpush1.msra.mxu0 %v1822
    %1843 = vmatprep.subr.mxu0 0.0
    %1844 = vmatpush1.msra.mxu0 %v1823
    %1845 = vmatprep.subr.mxu0 0.0
    %1846 = vmatpush1.msra.mxu0 %v1824
    %1847 = vmatprep.subr.mxu0 0.0
    %1848 = vmatpush1.msra.mxu0 %v1825
    %1849 = vmatprep.subr.mxu0 0.0
    %1850 = vmatpush1.msra.mxu0 0.0
    %1851 = vmatprep.subr.mxu0 0.0
    %1852 = vmatpush1.msra.mxu0 0.0
    %1853 = vmatprep.subr.mxu0 0.0
    %1854 = vmatpush1.msra.mxu0 0.0
    %1855 = vmatprep.subr.mxu0 0.0
    %1856 = vmatpush1.msra.mxu0 0.0
    %1857 = vmatprep.subr.mxu0 0.0
    %1858 = vmatpush1.msra.mxu0 0.0
    %1859 = vmatprep.subr.mxu0 0.0
    %1860 = vmatpush1.msra.mxu0 0.0
    %1861 = vmatprep.subr.mxu0 0.0
    %1862 = vmatpush1.msra.mxu0 0.0
    %1863 = vmatprep.subr.mxu0 0.0
    %1864 = vmatpush1.msra.mxu0 0.0
    %1865 = vmatprep.subr.mxu0 0.0
    %1866 = vmatpush1.msra.mxu0 0.0
    %1867 = vmatprep.subr.mxu0 0.0
    %1868 = vmatpush1.msra.mxu0 0.0
    %1869 = vmatprep.subr.mxu0 0.0
    %1870 = vmatpush1.msra.mxu0 0.0
    %1871 = vmatprep.subr.mxu0 0.0
    %1872 = vmatpush1.msra.mxu0 0.0
    %1873 = vmatprep.subr.mxu0 0.0
    %1874 = vmatpush1.msra.mxu0 0.0
    %1875 = vmatprep.subr.mxu0 0.0
    %1876 = vmatpush1.msra.mxu0 0.0
    %1877 = vmatprep.subr.mxu0 0.0
    %1878 = vmatpush1.msra.mxu0 0.0
    %1879 = vmatprep.subr.mxu0 0.0
    %1880 = vmatpush1.msra.mxu0 0.0
    %1881 = vmatprep.subr.mxu0 0.0
    %1882 = vmatpush1.msra.mxu0 0.0
    %1883 = vmatprep.subr.mxu0 0.0
    %1884 = vmatpush1.msra.mxu0 0.0
    %1885 = vmatprep.subr.mxu0 0.0
    %1886 = vmatpush1.msra.mxu0 0.0
    %1887 = vmatprep.subr.mxu0 0.0
    %1888 = vmatpush1.msra.mxu0 0.0
    %1889 = vmatprep.subr.mxu0 0.0
    %1890 = vmatpush1.msra.mxu0 0.0
    %1891 = vmatprep.subr.mxu0 0.0
    %1892 = vmatpush1.msra.mxu0 0.0
    %1893 = vmatprep.subr.mxu0 0.0
    %1894 = vmatpush1.msra.mxu0 0.0
    %1895 = vmatprep.subr.mxu0 0.0
    %1896 = vmatpush1.msra.mxu0 0.0
    %1897 = vmatprep.subr.mxu0 0.0
    %1898 = vmatpush1.msra.mxu0 0.0
    %1899 = vmatprep.subr.mxu0 0.0
    %1900 = vmatpush1.msra.mxu0 0.0
    %1901 = vmatprep.mubr.f32.mxu0 0.0
    %1902 = vmatmul.mubr.f32.gmra.mrb[0].mxu0 %v1835
    %v1903 = vpop.f32.mrb[0].mxu0
    %v1904 = vadd.f32 %v1831, %v1903
    %v1905 = vpop.f32.mrb[0].mxu0
    %1906 = vdwg.mxu0
    %1907 = vst [vmem:[#allocation2] sm:$0x3] %v1904
    // Predicated region
    $region42: #{rnn_forward.1} parent=1 // pred_check
      _
    $region43: #{rnn_forward.1} parent=1 // pred_check_branch
      %1909 = sbr.rel (0) target = $region45
    $region44: #{rnn_forward.1} parent=1 // pred_region
      %s1911 = ssub.s32 32, 32
      %1912 = vsyncadd [#allocation3], %s1911
      %s1914 = sshll.u32 [#allocation2], 4
      %s1915 = int_to_ptr.vmem [resolvable:$true] %s1914
      %1917 = dma.vmem_to_hbm [thread:$0]  %s1915, 32, %s10, [#allocation3]
    $region45: #{rnn_forward.1} parent=1 // pred_fallthru
      _
    // Predicated region
    $region46: #{rnn_forward.1} parent=1 // pred_check
      _
    $region47: #{rnn_forward.1} parent=1 // pred_check_branch
      %1919 = sbr.rel (0) target = $region49
    $region48: #{rnn_forward.1} parent=1 // pred_region
      %1920 = dma.done [#allocation3], 32
    $region49: #{rnn_forward.1} parent=1 // pred_fallthru
      _
    %1921 = vsyncpa [#allocation3], 1

</llo_original>
